<compile_context>
chip_gen: v6e
topology: v6e:2x2x1
jax: 0.10.0
libtpu: 0.0.40
codegen_flags: <defaults>
</compile_context>

<pallas_src>
import functools

import jax
import jax.numpy as jnp
from jax.experimental import pallas as pl
from jax.experimental.pallas import tpu as pltpu


# ----------------------------------------------------------------------------
# Pallas kernel: one tiled, fused SAGEConv layer (+ optional ReLU)
# ----------------------------------------------------------------------------
def _sage_layer_kernel(xs_ref, a_ref, z_ref, wl_ref, wr_ref, b_ref, o_ref,
                       acc_ref, *, apply_relu):
    k = pl.program_id(1)

    @pl.when(k == 0)
    def _init():
        acc_ref[...] = jnp.zeros_like(acc_ref)

    # mean-aggregation partial sum: (tm, tk)bf16 @ (tk, Cp)bf16 -> f32 acc
    acc_ref[...] += jnp.dot(a_ref[...], z_ref[...],
                            preferred_element_type=jnp.float32)

    @pl.when(k == pl.num_programs(1) - 1)
    def _finalize():
        agg = acc_ref[...].astype(jnp.bfloat16)
        h = (
            jnp.dot(xs_ref[...], wl_ref[...],
                    preferred_element_type=jnp.float32)      # self path
            + jnp.dot(agg, wr_ref[...],
                      preferred_element_type=jnp.float32)    # neighbor path
            + b_ref[...]                                      # (1, Co) broadcast
        )
        if apply_relu:
            h = jnp.maximum(h, 0.0)
        o_ref[...] = h.astype(o_ref.dtype)


def sage_layer(x_pad, a_pad, w_l, w_r, bias, *, apply_relu, out_dtype, tm, tk):
    """One SAGEConv layer on lane-padded inputs.

    x_pad: (Np, Cp)   bf16 node features (zero-padded rows / channels)
    a_pad: (Np, Np)   bf16 row-normalized adjacency (zero-padded)
    w_l:   (Cp, Co)   bf16 self-transform weight  (pre-transposed, padded)
    w_r:   (Cp, Co)   bf16 neighbor-transform weight
    bias:  (1, Co)    f32
    """
    np_, cp = x_pad.shape
    co = w_l.shape[1]
    kernel = functools.partial(_sage_layer_kernel, apply_relu=apply_relu)

    return pl.pallas_call(
        kernel,
        out_shape=jax.ShapeDtypeStruct((np_, co), out_dtype),
        grid_spec=pltpu.PrefetchScalarGridSpec(
            num_scalar_prefetch=0,
            grid=(np_ // tm, np_ // tk),          # reduction axis last
            in_specs=[
                pl.BlockSpec((tm, cp), lambda i, k: (i, 0)),   # self rows
                pl.BlockSpec((tm, tk), lambda i, k: (i, k)),   # adjacency tile
                pl.BlockSpec((tk, cp), lambda i, k: (k, 0)),   # neighbor rows
                pl.BlockSpec((cp, co), lambda i, k: (0, 0)),   # Wl
                pl.BlockSpec((cp, co), lambda i, k: (0, 0)),   # Wr
                pl.BlockSpec((1, co), lambda i, k: (0, 0)),    # bias
            ],
            out_specs=pl.BlockSpec((tm, co), lambda i, k: (i, 0)),
            scratch_shapes=[pltpu.VMEM((tm, cp), jnp.float32)],
        ),
        compiler_params=pltpu.CompilerParams(
            dimension_semantics=("parallel", "arbitrary")),
    )(x_pad, a_pad, x_pad, w_l, w_r, bias)


# ----------------------------------------------------------------------------
# Plain-JAX glue
# ----------------------------------------------------------------------------
def build_mean_adjacency(edge_index, num_nodes):
    """edge_index: (2, E) int32, row 0 = source, row 1 = target.
    A_mean[i, j] = 1/deg(i) if edge j -> i; zero-in-degree rows aggregate 0."""
    src, dst = edge_index[0], edge_index[1]
    adj = jnp.zeros((num_nodes, num_nodes), dtype=jnp.float32)
    adj = adj.at[dst, src].add(1.0)
    deg = jnp.sum(adj, axis=1, keepdims=True)
    return adj / jnp.maximum(deg, 1.0)


def _round_up(v, m):
    return ((v + m - 1) // m) * m


def _pad2d(a, rows, cols):
    r, c = a.shape
    return jnp.pad(a, ((0, rows - r), (0, cols - c)))


# ----------------------------------------------------------------------------
# SAGENet forward
# ----------------------------------------------------------------------------
def sagenet_forward(x, edge_index, params):
    n, in_c = x.shape
    hid_c = params["conv1"]["w_l"].shape[1]
    out_c = params["conv2"]["w_l"].shape[1]

    # Generation-safe tile sizes: multiples of (8, 128); A tile <= (512,512)
    # bf16 = 0.5 MiB so double buffering fits every TPU's default scoped VMEM.
    tm = tk = min(512, _round_up(n, 128))
    np_ = _round_up(n, tm)

    cin_p = _round_up(in_c, 128)
    hid_p = _round_up(hid_c, 128)
    out_p = _round_up(out_c, 128)

    # bf16 streams (A dominates HBM traffic); zero padding keeps semantics.
    a_pad = _pad2d(build_mean_adjacency(edge_index, n), np_, np_).astype(jnp.bfloat16)
    x_pad = _pad2d(x, np_, cin_p).astype(jnp.bfloat16)

    wl1 = _pad2d(params["conv1"]["w_l"], cin_p, hid_p).astype(jnp.bfloat16)
    wr1 = _pad2d(params["conv1"]["w_r"], cin_p, hid_p).astype(jnp.bfloat16)
    b1 = jnp.pad(params["conv1"]["b"], (0, hid_p - hid_c)).reshape(1, hid_p).astype(jnp.float32)

    # layer 1 (+ ReLU); keep output lane-padded & bf16 for layer 2's streams
    h = sage_layer(x_pad, a_pad, wl1, wr1, b1,
                   apply_relu=True, out_dtype=jnp.bfloat16, tm=tm, tk=tk)

    # dropout(0.5): eval-mode identity (see TODO at top)

    wl2 = _pad2d(params["conv2"]["w_l"], hid_p, out_p).astype(jnp.bfloat16)
    wr2 = _pad2d(params["conv2"]["w_r"], hid_p, out_p).astype(jnp.bfloat16)
    b2 = jnp.pad(params["conv2"]["b"], (0, out_p - out_c)).reshape(1, out_p).astype(jnp.float32)

    out_pad = sage_layer(h, a_pad, wl2, wr2, b2,
                         apply_relu=False, out_dtype=jnp.float32, tm=tm, tk=tk)
    return out_pad[:n, :out_c]


def sagenet_reference(x, edge_index, params):
    """Pure-JAX f32 reference for tolerance checking."""
    a = build_mean_adjacency(edge_index, x.shape[0])
    h = (x @ params["conv1"]["w_l"] + (a @ x) @ params["conv1"]["w_r"]
         + params["conv1"]["b"])
    h = jnp.maximum(h, 0.0)
    return (h @ params["conv2"]["w_l"] + (a @ h) @ params["conv2"]["w_r"]
            + params["conv2"]["b"])


def init_params(key, in_c, hid_c, out_c=2):
    k1, k2, k3, k4 = jax.random.split(key, 4)
    scale1 = 1.0 / jnp.sqrt(in_c)
    scale2 = 1.0 / jnp.sqrt(hid_c)
    return {
        "conv1": {
            # stored pre-transposed: (C_in, C_out)
            "w_l": jax.random.uniform(k1, (in_c, hid_c), jnp.float32, -scale1, scale1),
            "w_r": jax.random.uniform(k2, (in_c, hid_c), jnp.float32, -scale1, scale1),
            "b": jnp.zeros((hid_c,), jnp.float32),
        },
        "conv2": {
            "w_l": jax.random.uniform(k3, (hid_c, out_c), jnp.float32, -scale2, scale2),
            "w_r": jax.random.uniform(k4, (hid_c, out_c), jnp.float32, -scale2, scale2),
            "b": jnp.zeros((out_c,), jnp.float32),
        },
    }


if __name__ == "__main__":
    key = jax.random.PRNGKey(0)
    kx, kp = jax.random.split(key)

    # Small synthetic graph: 16 nodes, in_c=8 features, hid_c=32, 2 classes.
    num_nodes, in_c, hid_c = 16, 8, 32
    x = jax.random.normal(kx, (num_nodes, in_c), dtype=jnp.float32)

    # deterministic edge list: ring + a few chords (both directions, like nx.Graph)
    edges = []
    for i in range(num_nodes):
        j = (i + 1) % num_nodes
        edges.append((i, j))
        edges.append((j, i))
    for (u, v) in [(0, 8), (3, 11), (5, 13)]:
        edges.append((u, v))
        edges.append((v, u))
    edge_index = jnp.array(edges, dtype=jnp.int32).T  # (2, E)

    params = init_params(kp, in_c, hid_c, out_c=2)

    fwd = jax.jit(sagenet_forward)
    out = jax.block_until_ready(fwd(x, edge_index, params))

    ref = sagenet_reference(x, edge_index, params)
    assert out.shape == (num_nodes, 2)
    assert bool(jnp.all(jnp.isfinite(out)))
    assert float(jnp.max(jnp.abs(out - ref))) < 1e-1, "mismatch vs f32 reference"
    print("KERNEL_OK")
</pallas_src>

<mosaic_0001>
module attributes {stable_mosaic.version = 11 : i64} {
  func.func @_sage_layer_kernel(%arg0: i32, %arg1: i32, %arg2: memref<128x128xbf16, #tpu.memory_space<vmem>>, %arg3: memref<128x128xbf16, #tpu.memory_space<vmem>>, %arg4: memref<128x128xbf16, #tpu.memory_space<vmem>>, %arg5: memref<128x128xbf16, #tpu.memory_space<vmem>>, %arg6: memref<128x128xbf16, #tpu.memory_space<vmem>>, %arg7: memref<1x128xf32, #tpu.memory_space<vmem>>, %arg8: memref<128x128xbf16, #tpu.memory_space<vmem>>, %arg9: memref<128x128xf32, #tpu.memory_space<vmem>>) attributes {dimension_semantics = [#tpu.dimension_semantics<parallel>, #tpu.dimension_semantics<arbitrary>], iteration_bounds = array<i64: 1, 1>, scalar_prefetch = 0 : i64, scratch_operands = 1 : i64, tpu.core_type = #tpu.core_type<tc>, window_params = [{transform_indices = @transform_0, window_bounds = array<i64: 128, 128>}, {transform_indices = @transform_1, window_bounds = array<i64: 128, 128>}, {transform_indices = @transform_2, window_bounds = array<i64: 128, 128>}, {pipeline_mode = #tpu.pipeline_mode<synchronous>, transform_indices = @transform_3, window_bounds = array<i64: 128, 128>}, {pipeline_mode = #tpu.pipeline_mode<synchronous>, transform_indices = @transform_4, window_bounds = array<i64: 128, 128>}, {pipeline_mode = #tpu.pipeline_mode<synchronous>, transform_indices = @transform_5, window_bounds = array<i64: 1, 128>}, {transform_indices = @transform_6, window_bounds = array<i64: 128, 128>}]} {
    %c0_i32 = arith.constant 0 : i32
    %0 = arith.cmpi eq, %arg1, %c0_i32 : i32
    %1 = arith.extui %0 : i1 to i32
    %c0_i32_0 = arith.constant 0 : i32
    %2 = arith.cmpi ne, %1, %c0_i32_0 : i32
    scf.if %2 {
      %cst_10 = arith.constant 0.000000e+00 : f32
      %12 = vector.broadcast %cst_10 : f32 to vector<128x128xf32>
      %c0_11 = arith.constant 0 : index
      %c0_12 = arith.constant 0 : index
      %13 = vector.load %arg9[%c0_11, %c0_12] : memref<128x128xf32, #tpu.memory_space<vmem>>, vector<128x128xf32>
      tpu.vector_store %arg9[%c0_11, %c0_12], %12 {strides = array<i32>} : memref<128x128xf32, #tpu.memory_space<vmem>>, vector<128x128xf32>,
    } else {
    }
    %c0 = arith.constant 0 : index
    %c0_1 = arith.constant 0 : index
    %3 = vector.load %arg9[%c0, %c0_1] : memref<128x128xf32, #tpu.memory_space<vmem>>, vector<128x128xf32>
    %c0_2 = arith.constant 0 : index
    %c0_3 = arith.constant 0 : index
    %4 = vector.load %arg3[%c0_2, %c0_3] : memref<128x128xbf16, #tpu.memory_space<vmem>>, vector<128x128xbf16>
    %c0_4 = arith.constant 0 : index
    %c0_5 = arith.constant 0 : index
    %5 = vector.load %arg4[%c0_4, %c0_5] : memref<128x128xbf16, #tpu.memory_space<vmem>>, vector<128x128xbf16>
    %cst = arith.constant dense<0.000000e+00> : vector<128x128xf32>
    %6 = tpu.matmul %4, %5, %cst {dimension_numbers = #tpu.dot_dimension_numbers<[1], [0], [0], [1], [0, 0, 1, 1], [], []>} : vector<128x128xbf16>, vector<128x128xbf16>, vector<128x128xf32> -> vector<128x128xf32>
    %7 = arith.addf %3, %6 : vector<128x128xf32>
    %c0_6 = arith.constant 0 : index
    %c0_7 = arith.constant 0 : index
    %8 = vector.load %arg9[%c0_6, %c0_7] : memref<128x128xf32, #tpu.memory_space<vmem>>, vector<128x128xf32>
    tpu.vector_store %arg9[%c0_6, %c0_7], %7 {strides = array<i32>} : memref<128x128xf32, #tpu.memory_space<vmem>>, vector<128x128xf32>,
    %c0_i32_8 = arith.constant 0 : i32
    %9 = arith.cmpi eq, %arg1, %c0_i32_8 : i32
    %10 = arith.extui %9 : i1 to i32
    %c0_i32_9 = arith.constant 0 : i32
    %11 = arith.cmpi ne, %10, %c0_i32_9 : i32
    scf.if %11 {
      %c0_10 = arith.constant 0 : index
      %c0_11 = arith.constant 0 : index
      %12 = vector.load %arg9[%c0_10, %c0_11] : memref<128x128xf32, #tpu.memory_space<vmem>>, vector<128x128xf32>
      %13 = arith.truncf %12 : vector<128x128xf32> to vector<128x128xbf16>
      %c0_12 = arith.constant 0 : index
      %c0_13 = arith.constant 0 : index
      %14 = vector.load %arg2[%c0_12, %c0_13] : memref<128x128xbf16, #tpu.memory_space<vmem>>, vector<128x128xbf16>
      %c0_14 = arith.constant 0 : index
      %c0_15 = arith.constant 0 : index
      %15 = vector.load %arg5[%c0_14, %c0_15] : memref<128x128xbf16, #tpu.memory_space<vmem>>, vector<128x128xbf16>
      %cst_16 = arith.constant dense<0.000000e+00> : vector<128x128xf32>
      %16 = tpu.matmul %14, %15, %cst_16 {dimension_numbers = #tpu.dot_dimension_numbers<[1], [0], [0], [1], [0, 0, 1, 1], [], []>} : vector<128x128xbf16>, vector<128x128xbf16>, vector<128x128xf32> -> vector<128x128xf32>
      %c0_17 = arith.constant 0 : index
      %c0_18 = arith.constant 0 : index
      %17 = vector.load %arg6[%c0_17, %c0_18] : memref<128x128xbf16, #tpu.memory_space<vmem>>, vector<128x128xbf16>
      %cst_19 = arith.constant dense<0.000000e+00> : vector<128x128xf32>
      %18 = tpu.matmul %13, %17, %cst_19 {dimension_numbers = #tpu.dot_dimension_numbers<[1], [0], [0], [1], [0, 0, 1, 1], [], []>} : vector<128x128xbf16>, vector<128x128xbf16>, vector<128x128xf32> -> vector<128x128xf32>
      %19 = arith.addf %16, %18 : vector<128x128xf32>
      %c0_20 = arith.constant 0 : index
      %c0_21 = arith.constant 0 : index
      %20 = vector.load %arg7[%c0_20, %c0_21] : memref<1x128xf32, #tpu.memory_space<vmem>>, vector<1x128xf32>
      %21 = vector.broadcast %20 : vector<1x128xf32> to vector<128x128xf32>
      %22 = arith.addf %19, %21 : vector<128x128xf32>
      %cst_22 = arith.constant 0.000000e+00 : f32
      %23 = vector.broadcast %cst_22 : f32 to vector<128x128xf32>
      %24 = arith.maximumf %22, %23 : vector<128x128xf32>
      %25 = arith.truncf %24 : vector<128x128xf32> to vector<128x128xbf16>
      %c0_23 = arith.constant 0 : index
      %c0_24 = arith.constant 0 : index
      %26 = vector.load %arg8[%c0_23, %c0_24] : memref<128x128xbf16, #tpu.memory_space<vmem>>, vector<128x128xbf16>
      tpu.vector_store %arg8[%c0_23, %c0_24], %25 {strides = array<i32>} : memref<128x128xbf16, #tpu.memory_space<vmem>>, vector<128x128xbf16>,
    } else {
    }
    return
  }
  func.func @transform_0(%arg0: i32, %arg1: i32) -> (i32, i32) {
    %c0_i32 = arith.constant 0 : i32
    %c0_i32_0 = arith.constant 0 : i32
    return %arg0, %c0_i32 : i32, i32
  }
  func.func @transform_1(%arg0: i32, %arg1: i32) -> (i32, i32) {
    %c0_i32 = arith.constant 0 : i32
    return %arg0, %arg1 : i32, i32
  }
  func.func @transform_2(%arg0: i32, %arg1: i32) -> (i32, i32) {
    %c0_i32 = arith.constant 0 : i32
    %c0_i32_0 = arith.constant 0 : i32
    return %arg1, %c0_i32 : i32, i32
  }
  func.func @transform_3(%arg0: i32, %arg1: i32) -> (i32, i32) {
    %c0_i32 = arith.constant 0 : i32
    %c0_i32_0 = arith.constant 0 : i32
    %c0_i32_1 = arith.constant 0 : i32
    return %c0_i32, %c0_i32_0 : i32, i32
  }
  func.func @transform_4(%arg0: i32, %arg1: i32) -> (i32, i32) {
    %c0_i32 = arith.constant 0 : i32
    %c0_i32_0 = arith.constant 0 : i32
    %c0_i32_1 = arith.constant 0 : i32
    return %c0_i32, %c0_i32_0 : i32, i32
  }
  func.func @transform_5(%arg0: i32, %arg1: i32) -> (i32, i32) {
    %c0_i32 = arith.constant 0 : i32
    %c0_i32_0 = arith.constant 0 : i32
    %c0_i32_1 = arith.constant 0 : i32
    return %c0_i32, %c0_i32_0 : i32, i32
  }
  func.func @transform_6(%arg0: i32, %arg1: i32) -> (i32, i32) {
    %c0_i32 = arith.constant 0 : i32
    %c0_i32_0 = arith.constant 0 : i32
    return %arg0, %c0_i32 : i32, i32
  }
}

module attributes {stable_mosaic.version = 11 : i64} {
  func.func @_sage_layer_kernel(%arg0: i32, %arg1: i32, %arg2: memref<128x128xbf16, #tpu.memory_space<vmem>>, %arg3: memref<128x128xbf16, #tpu.memory_space<vmem>>, %arg4: memref<128x128xbf16, #tpu.memory_space<vmem>>, %arg5: memref<128x128xbf16, #tpu.memory_space<vmem>>, %arg6: memref<128x128xbf16, #tpu.memory_space<vmem>>, %arg7: memref<1x128xf32, #tpu.memory_space<vmem>>, %arg8: memref<128x128xf32, #tpu.memory_space<vmem>>, %arg9: memref<128x128xf32, #tpu.memory_space<vmem>>) attributes {dimension_semantics = [#tpu.dimension_semantics<parallel>, #tpu.dimension_semantics<arbitrary>], iteration_bounds = array<i64: 1, 1>, scalar_prefetch = 0 : i64, scratch_operands = 1 : i64, tpu.core_type = #tpu.core_type<tc>, window_params = [{transform_indices = @transform_0, window_bounds = array<i64: 128, 128>}, {transform_indices = @transform_1, window_bounds = array<i64: 128, 128>}, {transform_indices = @transform_2, window_bounds = array<i64: 128, 128>}, {pipeline_mode = #tpu.pipeline_mode<synchronous>, transform_indices = @transform_3, window_bounds = array<i64: 128, 128>}, {pipeline_mode = #tpu.pipeline_mode<synchronous>, transform_indices = @transform_4, window_bounds = array<i64: 128, 128>}, {pipeline_mode = #tpu.pipeline_mode<synchronous>, transform_indices = @transform_5, window_bounds = array<i64: 1, 128>}, {transform_indices = @transform_6, window_bounds = array<i64: 128, 128>}]} {
    %c0_i32 = arith.constant 0 : i32
    %0 = arith.cmpi eq, %arg1, %c0_i32 : i32
    %1 = arith.extui %0 : i1 to i32
    %c0_i32_0 = arith.constant 0 : i32
    %2 = arith.cmpi ne, %1, %c0_i32_0 : i32
    scf.if %2 {
      %cst_10 = arith.constant 0.000000e+00 : f32
      %12 = vector.broadcast %cst_10 : f32 to vector<128x128xf32>
      %c0_11 = arith.constant 0 : index
      %c0_12 = arith.constant 0 : index
      %13 = vector.load %arg9[%c0_11, %c0_12] : memref<128x128xf32, #tpu.memory_space<vmem>>, vector<128x128xf32>
      tpu.vector_store %arg9[%c0_11, %c0_12], %12 {strides = array<i32>} : memref<128x128xf32, #tpu.memory_space<vmem>>, vector<128x128xf32>,
    } else {
    }
    %c0 = arith.constant 0 : index
    %c0_1 = arith.constant 0 : index
    %3 = vector.load %arg9[%c0, %c0_1] : memref<128x128xf32, #tpu.memory_space<vmem>>, vector<128x128xf32>
    %c0_2 = arith.constant 0 : index
    %c0_3 = arith.constant 0 : index
    %4 = vector.load %arg3[%c0_2, %c0_3] : memref<128x128xbf16, #tpu.memory_space<vmem>>, vector<128x128xbf16>
    %c0_4 = arith.constant 0 : index
    %c0_5 = arith.constant 0 : index
    %5 = vector.load %arg4[%c0_4, %c0_5] : memref<128x128xbf16, #tpu.memory_space<vmem>>, vector<128x128xbf16>
    %cst = arith.constant dense<0.000000e+00> : vector<128x128xf32>
    %6 = tpu.matmul %4, %5, %cst {dimension_numbers = #tpu.dot_dimension_numbers<[1], [0], [0], [1], [0, 0, 1, 1], [], []>} : vector<128x128xbf16>, vector<128x128xbf16>, vector<128x128xf32> -> vector<128x128xf32>
    %7 = arith.addf %3, %6 : vector<128x128xf32>
    %c0_6 = arith.constant 0 : index
    %c0_7 = arith.constant 0 : index
    %8 = vector.load %arg9[%c0_6, %c0_7] : memref<128x128xf32, #tpu.memory_space<vmem>>, vector<128x128xf32>
    tpu.vector_store %arg9[%c0_6, %c0_7], %7 {strides = array<i32>} : memref<128x128xf32, #tpu.memory_space<vmem>>, vector<128x128xf32>,
    %c0_i32_8 = arith.constant 0 : i32
    %9 = arith.cmpi eq, %arg1, %c0_i32_8 : i32
    %10 = arith.extui %9 : i1 to i32
    %c0_i32_9 = arith.constant 0 : i32
    %11 = arith.cmpi ne, %10, %c0_i32_9 : i32
    scf.if %11 {
      %c0_10 = arith.constant 0 : index
      %c0_11 = arith.constant 0 : index
      %12 = vector.load %arg9[%c0_10, %c0_11] : memref<128x128xf32, #tpu.memory_space<vmem>>, vector<128x128xf32>
      %13 = arith.truncf %12 : vector<128x128xf32> to vector<128x128xbf16>
      %c0_12 = arith.constant 0 : index
      %c0_13 = arith.constant 0 : index
      %14 = vector.load %arg2[%c0_12, %c0_13] : memref<128x128xbf16, #tpu.memory_space<vmem>>, vector<128x128xbf16>
      %c0_14 = arith.constant 0 : index
      %c0_15 = arith.constant 0 : index
      %15 = vector.load %arg5[%c0_14, %c0_15] : memref<128x128xbf16, #tpu.memory_space<vmem>>, vector<128x128xbf16>
      %cst_16 = arith.constant dense<0.000000e+00> : vector<128x128xf32>
      %16 = tpu.matmul %14, %15, %cst_16 {dimension_numbers = #tpu.dot_dimension_numbers<[1], [0], [0], [1], [0, 0, 1, 1], [], []>} : vector<128x128xbf16>, vector<128x128xbf16>, vector<128x128xf32> -> vector<128x128xf32>
      %c0_17 = arith.constant 0 : index
      %c0_18 = arith.constant 0 : index
      %17 = vector.load %arg6[%c0_17, %c0_18] : memref<128x128xbf16, #tpu.memory_space<vmem>>, vector<128x128xbf16>
      %cst_19 = arith.constant dense<0.000000e+00> : vector<128x128xf32>
      %18 = tpu.matmul %13, %17, %cst_19 {dimension_numbers = #tpu.dot_dimension_numbers<[1], [0], [0], [1], [0, 0, 1, 1], [], []>} : vector<128x128xbf16>, vector<128x128xbf16>, vector<128x128xf32> -> vector<128x128xf32>
      %19 = arith.addf %16, %18 : vector<128x128xf32>
      %c0_20 = arith.constant 0 : index
      %c0_21 = arith.constant 0 : index
      %20 = vector.load %arg7[%c0_20, %c0_21] : memref<1x128xf32, #tpu.memory_space<vmem>>, vector<1x128xf32>
      %21 = vector.broadcast %20 : vector<1x128xf32> to vector<128x128xf32>
      %22 = arith.addf %19, %21 : vector<128x128xf32>
      %c0_22 = arith.constant 0 : index
      %c0_23 = arith.constant 0 : index
      %23 = vector.load %arg8[%c0_22, %c0_23] : memref<128x128xf32, #tpu.memory_space<vmem>>, vector<128x128xf32>
      tpu.vector_store %arg8[%c0_22, %c0_23], %22 {strides = array<i32>} : memref<128x128xf32, #tpu.memory_space<vmem>>, vector<128x128xf32>,
    } else {
    }
    return
  }
  func.func @transform_0(%arg0: i32, %arg1: i32) -> (i32, i32) {
    %c0_i32 = arith.constant 0 : i32
    %c0_i32_0 = arith.constant 0 : i32
    return %arg0, %c0_i32 : i32, i32
  }
  func.func @transform_1(%arg0: i32, %arg1: i32) -> (i32, i32) {
    %c0_i32 = arith.constant 0 : i32
    return %arg0, %arg1 : i32, i32
  }
  func.func @transform_2(%arg0: i32, %arg1: i32) -> (i32, i32) {
    %c0_i32 = arith.constant 0 : i32
    %c0_i32_0 = arith.constant 0 : i32
    return %arg1, %c0_i32 : i32, i32
  }
  func.func @transform_3(%arg0: i32, %arg1: i32) -> (i32, i32) {
    %c0_i32 = arith.constant 0 : i32
    %c0_i32_0 = arith.constant 0 : i32
    %c0_i32_1 = arith.constant 0 : i32
    return %c0_i32, %c0_i32_0 : i32, i32
  }
  func.func @transform_4(%arg0: i32, %arg1: i32) -> (i32, i32) {
    %c0_i32 = arith.constant 0 : i32
    %c0_i32_0 = arith.constant 0 : i32
    %c0_i32_1 = arith.constant 0 : i32
    return %c0_i32, %c0_i32_0 : i32, i32
  }
  func.func @transform_5(%arg0: i32, %arg1: i32) -> (i32, i32) {
    %c0_i32 = arith.constant 0 : i32
    %c0_i32_0 = arith.constant 0 : i32
    %c0_i32_1 = arith.constant 0 : i32
    return %c0_i32, %c0_i32_0 : i32, i32
  }
  func.func @transform_6(%arg0: i32, %arg1: i32) -> (i32, i32) {
    %c0_i32 = arith.constant 0 : i32
    %c0_i32_0 = arith.constant 0 : i32
    return %arg0, %c0_i32 : i32, i32
  }
}

</mosaic_0001>

<llo_original>
// kernel: sagenet_forward.3
$region0: #{sagenet_forward.3}
  #allocation0 [shape = 'u32[]', space=smem, size = 0x4, offset = 0x4, fixed_abs, tag = 'smem constant byte address 0x4 - core index']
  #allocation1 [shape = 'u32[144,128]{1,0:T(1,128)}', space=vmem, size = 0x12000, scoped, tag = 'internal scratch']
  #allocation2 [shape = 'f32[128,128]{1,0:T(8,128)}', space=vmem, size = 0x10000, scoped, tag = 'scratch operand']
  %s0 = inlined_call_operand.vmem [shape: bf16[128,128], index: 0, kind: input, shape index: {}, may-alias: {0,2}]
  %s1 = inlined_call_operand.vmem [shape: bf16[128,128], index: 1, kind: input, shape index: {}]
  %s2 = inlined_call_operand.vmem [shape: bf16[128,128], index: 2, kind: input, shape index: {}, may-alias: {0,2}]
  %s3 = inlined_call_operand.vmem [shape: bf16[128,128], index: 3, kind: input, shape index: {}]
  %s4 = inlined_call_operand.vmem [shape: bf16[128,128], index: 4, kind: input, shape index: {}]
  %s5 = inlined_call_operand.vmem [shape: f32[1,128], index: 5, kind: input, shape index: {}]
  %s6 = inlined_call_operand.vmem [shape: f32[128,128], index: 6, kind: output, shape index: {}]
  %s7 = sld [smem:[#allocation0]]
  $region42: #{sagenet_forward.3} parent=0
    _
  %s9 = ssub.s32 1, %s7
  %s10 = scalar_select 0, %s9, %s7
  // Predicated region
  $region2: #{sagenet_forward.3} parent=0 // pred_check
    _
  $region3: #{sagenet_forward.3} parent=0 // pred_check_branch
    %12 = sbr.rel (0) target = $region5
  $region4: #{sagenet_forward.3} parent=0 // pred_region
    _
  $region5: #{sagenet_forward.3} parent=0 // pred_fallthru
    _
  // Predicated region
  $region6: #{sagenet_forward.3} parent=0 // pred_check
    _
  $region7: #{sagenet_forward.3} parent=0 // pred_check_branch
    %14 = sbr.rel (0) target = $region9
  $region8: #{sagenet_forward.3} parent=0 // pred_region
    _
  $region9: #{sagenet_forward.3} parent=0 // pred_fallthru
    _
  // Predicated region
  $region10: #{sagenet_forward.3} parent=0 // pred_check
    _
  $region11: #{sagenet_forward.3} parent=0 // pred_check_branch
    %16 = sbr.rel (0) target = $region13
  $region12: #{sagenet_forward.3} parent=0 // pred_region
    _
  $region13: #{sagenet_forward.3} parent=0 // pred_fallthru
    _
  // Predicated region
  $region14: #{sagenet_forward.3} parent=0 // pred_check
    _
  $region15: #{sagenet_forward.3} parent=0 // pred_check_branch
    %18 = sbr.rel (0) target = $region17
  $region16: #{sagenet_forward.3} parent=0 // pred_region
    _
  $region17: #{sagenet_forward.3} parent=0 // pred_fallthru
    _
  // Predicated region
  $region18: #{sagenet_forward.3} parent=0 // pred_check
    _
  $region19: #{sagenet_forward.3} parent=0 // pred_check_branch
    %20 = sbr.rel (0) target = $region21
  $region20: #{sagenet_forward.3} parent=0 // pred_region
    _
  $region21: #{sagenet_forward.3} parent=0 // pred_fallthru
    _
  // Predicated region
  $region22: #{sagenet_forward.3} parent=0 // pred_check
    _
  $region23: #{sagenet_forward.3} parent=0 // pred_check_branch
    %22 = sbr.rel (0) target = $region25
  $region24: #{sagenet_forward.3} parent=0 // pred_region
    _
  $region25: #{sagenet_forward.3} parent=0 // pred_fallthru
    _
  %p24 = scmp.eq.s32.totalorder 0, 0
  // Predicated region
  $region26: #{sagenet_forward.3} parent=0 // pred_check
    %p25 = pneg %p24
  $region27: #{sagenet_forward.3} parent=0 // pred_check_branch
    %27 = sbr.rel (%p25) target = $region29
  $region28: #{sagenet_forward.3} parent=0 // pred_region
    %28 = vst [vmem:[#allocation2] sm:$0xff] 0.0
    %29 = vst [vmem:[#allocation2 + $0x8] sm:$0xff] 0.0
    %30 = vst [vmem:[#allocation2 + $0x10] sm:$0xff] 0.0
    %31 = vst [vmem:[#allocation2 + $0x18] sm:$0xff] 0.0
    %32 = vst [vmem:[#allocation2 + $0x20] sm:$0xff] 0.0
    %33 = vst [vmem:[#allocation2 + $0x28] sm:$0xff] 0.0
    %34 = vst [vmem:[#allocation2 + $0x30] sm:$0xff] 0.0
    %35 = vst [vmem:[#allocation2 + $0x38] sm:$0xff] 0.0
    %36 = vst [vmem:[#allocation2 + $0x40] sm:$0xff] 0.0
    %37 = vst [vmem:[#allocation2 + $0x48] sm:$0xff] 0.0
    %38 = vst [vmem:[#allocation2 + $0x50] sm:$0xff] 0.0
    %39 = vst [vmem:[#allocation2 + $0x58] sm:$0xff] 0.0
    %40 = vst [vmem:[#allocation2 + $0x60] sm:$0xff] 0.0
    %41 = vst [vmem:[#allocation2 + $0x68] sm:$0xff] 0.0
    %42 = vst [vmem:[#allocation2 + $0x70] sm:$0xff] 0.0
    %43 = vst [vmem:[#allocation2 + $0x78] sm:$0xff] 0.0
  $region29: #{sagenet_forward.3} parent=0 // pred_fallthru
    _
  %v44 = vld [vmem:[#allocation2] sm:$0xff]
  %v45 = vld [vmem:[#allocation2 + $0x8] sm:$0xff]
  %v46 = vld [vmem:[#allocation2 + $0x10] sm:$0xff]
  %v47 = vld [vmem:[#allocation2 + $0x18] sm:$0xff]
  %v48 = vld [vmem:[#allocation2 + $0x20] sm:$0xff]
  %v49 = vld [vmem:[#allocation2 + $0x28] sm:$0xff]
  %v50 = vld [vmem:[#allocation2 + $0x30] sm:$0xff]
  %v51 = vld [vmem:[#allocation2 + $0x38] sm:$0xff]
  %v52 = vld [vmem:[#allocation2 + $0x40] sm:$0xff]
  %v53 = vld [vmem:[#allocation2 + $0x48] sm:$0xff]
  %v54 = vld [vmem:[#allocation2 + $0x50] sm:$0xff]
  %v55 = vld [vmem:[#allocation2 + $0x58] sm:$0xff]
  %v56 = vld [vmem:[#allocation2 + $0x60] sm:$0xff]
  %v57 = vld [vmem:[#allocation2 + $0x68] sm:$0xff]
  %v58 = vld [vmem:[#allocation2 + $0x70] sm:$0xff]
  %v59 = vld [vmem:[#allocation2 + $0x78] sm:$0xff]
  %v60 = vld [vmem:[%s1] sm:$0xf]
  %v61 = vld [vmem:[%s1 + $0x4] sm:$0xf]
  %v62 = vld [vmem:[%s1 + $0x8] sm:$0xf]
  %v63 = vld [vmem:[%s1 + $0xc] sm:$0xf]
  %v64 = vld [vmem:[%s1 + $0x10] sm:$0xf]
  %v65 = vld [vmem:[%s1 + $0x14] sm:$0xf]
  %v66 = vld [vmem:[%s1 + $0x18] sm:$0xf]
  %v67 = vld [vmem:[%s1 + $0x1c] sm:$0xf]
  %v68 = vld [vmem:[%s1 + $0x20] sm:$0xf]
  %v69 = vld [vmem:[%s1 + $0x24] sm:$0xf]
  %v70 = vld [vmem:[%s1 + $0x28] sm:$0xf]
  %v71 = vld [vmem:[%s1 + $0x2c] sm:$0xf]
  %v72 = vld [vmem:[%s1 + $0x30] sm:$0xf]
  %v73 = vld [vmem:[%s1 + $0x34] sm:$0xf]
  %v74 = vld [vmem:[%s1 + $0x38] sm:$0xf]
  %v75 = vld [vmem:[%s1 + $0x3c] sm:$0xf]
  %v76 = vld [vmem:[%s2] sm:$0xf]
  %v77 = vld [vmem:[%s2 + $0x4] sm:$0xf]
  %v78 = vld [vmem:[%s2 + $0x8] sm:$0xf]
  %v79 = vld [vmem:[%s2 + $0xc] sm:$0xf]
  %v80 = vld [vmem:[%s2 + $0x10] sm:$0xf]
  %v81 = vld [vmem:[%s2 + $0x14] sm:$0xf]
  %v82 = vld [vmem:[%s2 + $0x18] sm:$0xf]
  %v83 = vld [vmem:[%s2 + $0x1c] sm:$0xf]
  %v84 = vld [vmem:[%s2 + $0x20] sm:$0xf]
  %v85 = vld [vmem:[%s2 + $0x24] sm:$0xf]
  %v86 = vld [vmem:[%s2 + $0x28] sm:$0xf]
  %v87 = vld [vmem:[%s2 + $0x2c] sm:$0xf]
  %v88 = vld [vmem:[%s2 + $0x30] sm:$0xf]
  %v89 = vld [vmem:[%s2 + $0x34] sm:$0xf]
  %v90 = vld [vmem:[%s2 + $0x38] sm:$0xf]
  %v91 = vld [vmem:[%s2 + $0x3c] sm:$0xf]
  %v108 = vunpack.c.l.b16 %v60
  %v109 = vunpack.c.l.b16 %v61
  %v110 = vunpack.c.l.b16 %v62
  %v111 = vunpack.c.l.b16 %v63
  %v112 = vunpack.c.l.b16 %v64
  %v113 = vunpack.c.l.b16 %v65
  %v114 = vunpack.c.l.b16 %v66
  %v115 = vunpack.c.l.b16 %v67
  %v116 = vunpack.c.l.b16 %v68
  %v117 = vunpack.c.l.b16 %v69
  %v118 = vunpack.c.l.b16 %v70
  %v119 = vunpack.c.l.b16 %v71
  %v120 = vunpack.c.l.b16 %v72
  %v121 = vunpack.c.l.b16 %v73
  %v122 = vunpack.c.l.b16 %v74
  %v123 = vunpack.c.l.b16 %v75
  %v124 = vpack.c.b16 %v109, %v108
  %v125 = vpack.c.b16 %v111, %v110
  %v126 = vpack.c.b16 %v113, %v112
  %v127 = vpack.c.b16 %v115, %v114
  %v128 = vpack.c.b16 %v117, %v116
  %v129 = vpack.c.b16 %v119, %v118
  %v130 = vpack.c.b16 %v121, %v120
  %v131 = vpack.c.b16 %v123, %v122
  %v156 = vunpack.c.l.b16 %v76
  %v157 = vunpack.c.l.b16 %v77
  %v158 = vunpack.c.l.b16 %v78
  %v159 = vunpack.c.l.b16 %v79
  %v160 = vunpack.c.l.b16 %v80
  %v161 = vunpack.c.l.b16 %v81
  %v162 = vunpack.c.l.b16 %v82
  %v163 = vunpack.c.l.b16 %v83
  %v164 = vunpack.c.l.b16 %v84
  %v165 = vunpack.c.l.b16 %v85
  %v166 = vunpack.c.l.b16 %v86
  %v167 = vunpack.c.l.b16 %v87
  %v168 = vunpack.c.l.b16 %v88
  %v169 = vunpack.c.l.b16 %v89
  %v170 = vunpack.c.l.b16 %v90
  %v171 = vunpack.c.l.b16 %v91
  %v172 = vpack.c.b16 %v157, %v156
  %v173 = vpack.c.b16 %v159, %v158
  %v174 = vpack.c.b16 %v161, %v160
  %v175 = vpack.c.b16 %v163, %v162
  %v176 = vpack.c.b16 %v165, %v164
  %v177 = vpack.c.b16 %v167, %v166
  %v178 = vpack.c.b16 %v169, %v168
  %v179 = vpack.c.b16 %v171, %v170
  %188 = vmatprep.subr.bf16.mxu0 0
  %189 = vmatpush1.bf16.msra.mxu0 %v179
  %190 = vmatprep.subr.bf16.mxu0 0
  %191 = vmatpush1.bf16.msra.mxu0 %v178
  %192 = vmatprep.subr.bf16.mxu0 0
  %193 = vmatpush1.bf16.msra.mxu0 %v177
  %194 = vmatprep.subr.bf16.mxu0 0
  %195 = vmatpush1.bf16.msra.mxu0 %v176
  %196 = vmatprep.subr.bf16.mxu0 0
  %197 = vmatpush1.bf16.msra.mxu0 %v175
  %198 = vmatprep.subr.bf16.mxu0 0
  %199 = vmatpush1.bf16.msra.mxu0 %v174
  %200 = vmatprep.subr.bf16.mxu0 0
  %201 = vmatpush1.bf16.msra.mxu0 %v173
  %202 = vmatprep.subr.bf16.mxu0 0
  %203 = vmatpush1.bf16.msra.mxu0 %v172
  %204 = vmatprep.subr.bf16.mxu0 0
  %205 = vmatpush2.bf16.msra.mxu0 0
  %206 = vmatprep.subr.bf16.mxu0 0
  %207 = vmatpush2.bf16.msra.mxu0 0
  %208 = vmatprep.subr.bf16.mxu0 0
  %209 = vmatpush2.bf16.msra.mxu0 0
  %210 = vmatprep.subr.bf16.mxu0 0
  %211 = vmatpush2.bf16.msra.mxu0 0
  %212 = vmatprep.subr.bf16.mxu0 0
  %213 = vmatpush2.bf16.msra.mxu0 0
  %214 = vmatprep.subr.bf16.mxu0 0
  %215 = vmatpush2.bf16.msra.mxu0 0
  %216 = vmatprep.subr.bf16.mxu0 0
  %217 = vmatpush2.bf16.msra.mxu0 0
  %218 = vmatprep.subr.bf16.mxu0 0
  %219 = vmatpush2.bf16.msra.mxu0 0
  %220 = vmatprep.mubr.bf16.mxu0 0
  %221 = vmatmul.mubr.bf16.gmra.mxu0 %v124
  %v222 = vpop.f32.mrf.mxu0
  %v223 = vadd.f32 0.0, %v222
  %v224 = vpop.f32.mrf.mxu0
  %v225 = vpop.f32.mrf.mxu0
  %v226 = vadd.f32 0.0, %v225
  %v227 = vpop.f32.mrf.mxu0
  %228 = vmatprep.mubr.bf16.mxu0 0
  %229 = vmatmul.mubr.bf16.gmra.mxu0 %v125
  %v230 = vpop.f32.mrf.mxu0
  %v231 = vadd.f32 0.0, %v230
  %v232 = vpop.f32.mrf.mxu0
  %v233 = vpop.f32.mrf.mxu0
  %v234 = vadd.f32 0.0, %v233
  %v235 = vpop.f32.mrf.mxu0
  %236 = vmatprep.mubr.bf16.mxu0 0
  %237 = vmatmul.mubr.bf16.gmra.mxu0 %v126
  %v238 = vpop.f32.mrf.mxu0
  %v239 = vadd.f32 0.0, %v238
  %v240 = vpop.f32.mrf.mxu0
  %v241 = vpop.f32.mrf.mxu0
  %v242 = vadd.f32 0.0, %v241
  %v243 = vpop.f32.mrf.mxu0
  %244 = vmatprep.mubr.bf16.mxu0 0
  %245 = vmatmul.mubr.bf16.gmra.mxu0 %v127
  %v246 = vpop.f32.mrf.mxu0
  %v247 = vadd.f32 0.0, %v246
  %v248 = vpop.f32.mrf.mxu0
  %v249 = vpop.f32.mrf.mxu0
  %v250 = vadd.f32 0.0, %v249
  %v251 = vpop.f32.mrf.mxu0
  %252 = vmatprep.mubr.bf16.mxu0 0
  %253 = vmatmul.mubr.bf16.gmra.mxu0 %v128
  %v254 = vpop.f32.mrf.mxu0
  %v255 = vadd.f32 0.0, %v254
  %v256 = vpop.f32.mrf.mxu0
  %v257 = vpop.f32.mrf.mxu0
  %v258 = vadd.f32 0.0, %v257
  %v259 = vpop.f32.mrf.mxu0
  %260 = vmatprep.mubr.bf16.mxu0 0
  %261 = vmatmul.mubr.bf16.gmra.mxu0 %v129
  %v262 = vpop.f32.mrf.mxu0
  %v263 = vadd.f32 0.0, %v262
  %v264 = vpop.f32.mrf.mxu0
  %v265 = vpop.f32.mrf.mxu0
  %v266 = vadd.f32 0.0, %v265
  %v267 = vpop.f32.mrf.mxu0
  %268 = vmatprep.mubr.bf16.mxu0 0
  %269 = vmatmul.mubr.bf16.gmra.mxu0 %v130
  %v270 = vpop.f32.mrf.mxu0
  %v271 = vadd.f32 0.0, %v270
  %v272 = vpop.f32.mrf.mxu0
  %v273 = vpop.f32.mrf.mxu0
  %v274 = vadd.f32 0.0, %v273
  %v275 = vpop.f32.mrf.mxu0
  %276 = vmatprep.mubr.bf16.mxu0 0
  %277 = vmatmul.mubr.bf16.gmra.mxu0 %v131
  %v278 = vpop.f32.mrf.mxu0
  %v279 = vadd.f32 0.0, %v278
  %v280 = vpop.f32.mrf.mxu0
  %v281 = vpop.f32.mrf.mxu0
  %v282 = vadd.f32 0.0, %v281
  %v283 = vpop.f32.mrf.mxu0
  %284 = vdwg.mxu0
  %v285 = vadd.f32 %v44, %v223
  %v286 = vadd.f32 %v45, %v226
  %v287 = vadd.f32 %v46, %v231
  %v288 = vadd.f32 %v47, %v234
  %v289 = vadd.f32 %v48, %v239
  %v290 = vadd.f32 %v49, %v242
  %v291 = vadd.f32 %v50, %v247
  %v292 = vadd.f32 %v51, %v250
  %v293 = vadd.f32 %v52, %v255
  %v294 = vadd.f32 %v53, %v258
  %v295 = vadd.f32 %v54, %v263
  %v296 = vadd.f32 %v55, %v266
  %v297 = vadd.f32 %v56, %v271
  %v298 = vadd.f32 %v57, %v274
  %v299 = vadd.f32 %v58, %v279
  %v300 = vadd.f32 %v59, %v282
  %301 = vst [vmem:[#allocation2] sm:$0xff] %v285
  %302 = vst [vmem:[#allocation2 + $0x8] sm:$0xff] %v286
  %303 = vst [vmem:[#allocation2 + $0x10] sm:$0xff] %v287
  %304 = vst [vmem:[#allocation2 + $0x18] sm:$0xff] %v288
  %305 = vst [vmem:[#allocation2 + $0x20] sm:$0xff] %v289
  %306 = vst [vmem:[#allocation2 + $0x28] sm:$0xff] %v290
  %307 = vst [vmem:[#allocation2 + $0x30] sm:$0xff] %v291
  %308 = vst [vmem:[#allocation2 + $0x38] sm:$0xff] %v292
  %309 = vst [vmem:[#allocation2 + $0x40] sm:$0xff] %v293
  %310 = vst [vmem:[#allocation2 + $0x48] sm:$0xff] %v294
  %311 = vst [vmem:[#allocation2 + $0x50] sm:$0xff] %v295
  %312 = vst [vmem:[#allocation2 + $0x58] sm:$0xff] %v296
  %313 = vst [vmem:[#allocation2 + $0x60] sm:$0xff] %v297
  %314 = vst [vmem:[#allocation2 + $0x68] sm:$0xff] %v298
  %315 = vst [vmem:[#allocation2 + $0x70] sm:$0xff] %v299
  %316 = vst [vmem:[#allocation2 + $0x78] sm:$0xff] %v300
  // Predicated region
  $region30: #{sagenet_forward.3} parent=0 // pred_check
    %p317 = pneg %p24
  $region31: #{sagenet_forward.3} parent=0 // pred_check_branch
    %319 = sbr.rel (%p317) target = $region33
  $region32: #{sagenet_forward.3} parent=0 // pred_region
    %v320 = vld [vmem:[#allocation2] sm:$0xff]
    %v321 = vld [vmem:[#allocation2 + $0x8] sm:$0xff]
    %v322 = vld [vmem:[#allocation2 + $0x10] sm:$0xff]
    %v323 = vld [vmem:[#allocation2 + $0x18] sm:$0xff]
    %v324 = vld [vmem:[#allocation2 + $0x20] sm:$0xff]
    %v325 = vld [vmem:[#allocation2 + $0x28] sm:$0xff]
    %v326 = vld [vmem:[#allocation2 + $0x30] sm:$0xff]
    %v327 = vld [vmem:[#allocation2 + $0x38] sm:$0xff]
    %v328 = vld [vmem:[#allocation2 + $0x40] sm:$0xff]
    %v329 = vld [vmem:[#allocation2 + $0x48] sm:$0xff]
    %v330 = vld [vmem:[#allocation2 + $0x50] sm:$0xff]
    %v331 = vld [vmem:[#allocation2 + $0x58] sm:$0xff]
    %v332 = vld [vmem:[#allocation2 + $0x60] sm:$0xff]
    %v333 = vld [vmem:[#allocation2 + $0x68] sm:$0xff]
    %v334 = vld [vmem:[#allocation2 + $0x70] sm:$0xff]
    %v335 = vld [vmem:[#allocation2 + $0x78] sm:$0xff]
    %v336 = vpack.c.bf16 %v321, %v320
    %v337 = vpack.c.bf16 %v323, %v322
    %v338 = vpack.c.bf16 %v325, %v324
    %v339 = vpack.c.bf16 %v327, %v326
    %v340 = vpack.c.bf16 %v329, %v328
    %v341 = vpack.c.bf16 %v331, %v330
    %v342 = vpack.c.bf16 %v333, %v332
    %v343 = vpack.c.bf16 %v335, %v334
    %v344 = vld [vmem:[%s0] sm:$0xf]
    %v345 = vld [vmem:[%s0 + $0x4] sm:$0xf]
    %v346 = vld [vmem:[%s0 + $0x8] sm:$0xf]
    %v347 = vld [vmem:[%s0 + $0xc] sm:$0xf]
    %v348 = vld [vmem:[%s0 + $0x10] sm:$0xf]
    %v349 = vld [vmem:[%s0 + $0x14] sm:$0xf]
    %v350 = vld [vmem:[%s0 + $0x18] sm:$0xf]
    %v351 = vld [vmem:[%s0 + $0x1c] sm:$0xf]
    %v352 = vld [vmem:[%s0 + $0x20] sm:$0xf]
    %v353 = vld [vmem:[%s0 + $0x24] sm:$0xf]
    %v354 = vld [vmem:[%s0 + $0x28] sm:$0xf]
    %v355 = vld [vmem:[%s0 + $0x2c] sm:$0xf]
    %v356 = vld [vmem:[%s0 + $0x30] sm:$0xf]
    %v357 = vld [vmem:[%s0 + $0x34] sm:$0xf]
    %v358 = vld [vmem:[%s0 + $0x38] sm:$0xf]
    %v359 = vld [vmem:[%s0 + $0x3c] sm:$0xf]
    %v360 = vld [vmem:[%s3] sm:$0xf]
    %v361 = vld [vmem:[%s3 + $0x4] sm:$0xf]
    %v362 = vld [vmem:[%s3 + $0x8] sm:$0xf]
    %v363 = vld [vmem:[%s3 + $0xc] sm:$0xf]
    %v364 = vld [vmem:[%s3 + $0x10] sm:$0xf]
    %v365 = vld [vmem:[%s3 + $0x14] sm:$0xf]
    %v366 = vld [vmem:[%s3 + $0x18] sm:$0xf]
    %v367 = vld [vmem:[%s3 + $0x1c] sm:$0xf]
    %v368 = vld [vmem:[%s3 + $0x20] sm:$0xf]
    %v369 = vld [vmem:[%s3 + $0x24] sm:$0xf]
    %v370 = vld [vmem:[%s3 + $0x28] sm:$0xf]
    %v371 = vld [vmem:[%s3 + $0x2c] sm:$0xf]
    %v372 = vld [vmem:[%s3 + $0x30] sm:$0xf]
    %v373 = vld [vmem:[%s3 + $0x34] sm:$0xf]
    %v374 = vld [vmem:[%s3 + $0x38] sm:$0xf]
    %v375 = vld [vmem:[%s3 + $0x3c] sm:$0xf]
    %v376 = vld [vmem:[%s4] sm:$0xf]
    %v377 = vld [vmem:[%s4 + $0x4] sm:$0xf]
    %v378 = vld [vmem:[%s4 + $0x8] sm:$0xf]
    %v379 = vld [vmem:[%s4 + $0xc] sm:$0xf]
    %v380 = vld [vmem:[%s4 + $0x10] sm:$0xf]
    %v381 = vld [vmem:[%s4 + $0x14] sm:$0xf]
    %v382 = vld [vmem:[%s4 + $0x18] sm:$0xf]
    %v383 = vld [vmem:[%s4 + $0x1c] sm:$0xf]
    %v384 = vld [vmem:[%s4 + $0x20] sm:$0xf]
    %v385 = vld [vmem:[%s4 + $0x24] sm:$0xf]
    %v386 = vld [vmem:[%s4 + $0x28] sm:$0xf]
    %v387 = vld [vmem:[%s4 + $0x2c] sm:$0xf]
    %v388 = vld [vmem:[%s4 + $0x30] sm:$0xf]
    %v389 = vld [vmem:[%s4 + $0x34] sm:$0xf]
    %v390 = vld [vmem:[%s4 + $0x38] sm:$0xf]
    %v391 = vld [vmem:[%s4 + $0x3c] sm:$0xf]
    %v408 = vunpack.c.l.b16 %v376
    %v409 = vunpack.c.l.b16 %v377
    %v410 = vunpack.c.l.b16 %v378
    %v411 = vunpack.c.l.b16 %v379
    %v412 = vunpack.c.l.b16 %v380
    %v413 = vunpack.c.l.b16 %v381
    %v414 = vunpack.c.l.b16 %v382
    %v415 = vunpack.c.l.b16 %v383
    %v416 = vunpack.c.l.b16 %v384
    %v417 = vunpack.c.l.b16 %v385
    %v418 = vunpack.c.l.b16 %v386
    %v419 = vunpack.c.l.b16 %v387
    %v420 = vunpack.c.l.b16 %v388
    %v421 = vunpack.c.l.b16 %v389
    %v422 = vunpack.c.l.b16 %v390
    %v423 = vunpack.c.l.b16 %v391
    %v424 = vpack.c.b16 %v409, %v408
    %v425 = vpack.c.b16 %v411, %v410
    %v426 = vpack.c.b16 %v413, %v412
    %v427 = vpack.c.b16 %v415, %v414
    %v428 = vpack.c.b16 %v417, %v416
    %v429 = vpack.c.b16 %v419, %v418
    %v430 = vpack.c.b16 %v421, %v420
    %v431 = vpack.c.b16 %v423, %v422
    %440 = vmatprep.subr.bf16.mxu0 0
    %441 = vmatpush1.bf16.msra.mxu0 %v431
    %442 = vmatprep.subr.bf16.mxu0 0
    %443 = vmatpush1.bf16.msra.mxu0 %v430
    %444 = vmatprep.subr.bf16.mxu0 0
    %445 = vmatpush1.bf16.msra.mxu0 %v429
    %446 = vmatprep.subr.bf16.mxu0 0
    %447 = vmatpush1.bf16.msra.mxu0 %v428
    %448 = vmatprep.subr.bf16.mxu0 0
    %449 = vmatpush1.bf16.msra.mxu0 %v427
    %450 = vmatprep.subr.bf16.mxu0 0
    %451 = vmatpush1.bf16.msra.mxu0 %v426
    %452 = vmatprep.subr.bf16.mxu0 0
    %453 = vmatpush1.bf16.msra.mxu0 %v425
    %454 = vmatprep.subr.bf16.mxu0 0
    %455 = vmatpush1.bf16.msra.mxu0 %v424
    %456 = vmatprep.subr.bf16.mxu0 0
    %457 = vmatpush2.bf16.msra.mxu0 0
    %458 = vmatprep.subr.bf16.mxu0 0
    %459 = vmatpush2.bf16.msra.mxu0 0
    %460 = vmatprep.subr.bf16.mxu0 0
    %461 = vmatpush2.bf16.msra.mxu0 0
    %462 = vmatprep.subr.bf16.mxu0 0
    %463 = vmatpush2.bf16.msra.mxu0 0
    %464 = vmatprep.subr.bf16.mxu0 0
    %465 = vmatpush2.bf16.msra.mxu0 0
    %466 = vmatprep.subr.bf16.mxu0 0
    %467 = vmatpush2.bf16.msra.mxu0 0
    %468 = vmatprep.subr.bf16.mxu0 0
    %469 = vmatpush2.bf16.msra.mxu0 0
    %470 = vmatprep.subr.bf16.mxu0 0
    %471 = vmatpush2.bf16.msra.mxu0 0
    %472 = vmatprep.mubr.bf16.mxu0 0
    %473 = vmatmul.mubr.bf16.gmra.mxu0 %v336
    %v474 = vpop.f32.mrf.mxu0
    %v475 = vadd.f32 0.0, %v474
    %v476 = vpop.f32.mrf.mxu0
    %v477 = vpop.f32.mrf.mxu0
    %v478 = vadd.f32 0.0, %v477
    %v479 = vpop.f32.mrf.mxu0
    %480 = vmatprep.mubr.bf16.mxu0 0
    %481 = vmatmul.mubr.bf16.gmra.mxu0 %v337
    %v482 = vpop.f32.mrf.mxu0
    %v483 = vadd.f32 0.0, %v482
    %v484 = vpop.f32.mrf.mxu0
    %v485 = vpop.f32.mrf.mxu0
    %v486 = vadd.f32 0.0, %v485
    %v487 = vpop.f32.mrf.mxu0
    %488 = vmatprep.mubr.bf16.mxu0 0
    %489 = vmatmul.mubr.bf16.gmra.mxu0 %v338
    %v490 = vpop.f32.mrf.mxu0
    %v491 = vadd.f32 0.0, %v490
    %v492 = vpop.f32.mrf.mxu0
    %v493 = vpop.f32.mrf.mxu0
    %v494 = vadd.f32 0.0, %v493
    %v495 = vpop.f32.mrf.mxu0
    %496 = vmatprep.mubr.bf16.mxu0 0
    %497 = vmatmul.mubr.bf16.gmra.mxu0 %v339
    %v498 = vpop.f32.mrf.mxu0
    %v499 = vadd.f32 0.0, %v498
    %v500 = vpop.f32.mrf.mxu0
    %v501 = vpop.f32.mrf.mxu0
    %v502 = vadd.f32 0.0, %v501
    %v503 = vpop.f32.mrf.mxu0
    %504 = vmatprep.mubr.bf16.mxu0 0
    %505 = vmatmul.mubr.bf16.gmra.mxu0 %v340
    %v506 = vpop.f32.mrf.mxu0
    %v507 = vadd.f32 0.0, %v506
    %v508 = vpop.f32.mrf.mxu0
    %v509 = vpop.f32.mrf.mxu0
    %v510 = vadd.f32 0.0, %v509
    %v511 = vpop.f32.mrf.mxu0
    %512 = vmatprep.mubr.bf16.mxu0 0
    %513 = vmatmul.mubr.bf16.gmra.mxu0 %v341
    %v514 = vpop.f32.mrf.mxu0
    %v515 = vadd.f32 0.0, %v514
    %v516 = vpop.f32.mrf.mxu0
    %v517 = vpop.f32.mrf.mxu0
    %v518 = vadd.f32 0.0, %v517
    %v519 = vpop.f32.mrf.mxu0
    %520 = vmatprep.mubr.bf16.mxu0 0
    %521 = vmatmul.mubr.bf16.gmra.mxu0 %v342
    %v522 = vpop.f32.mrf.mxu0
    %v523 = vadd.f32 0.0, %v522
    %v524 = vpop.f32.mrf.mxu0
    %v525 = vpop.f32.mrf.mxu0
    %v526 = vadd.f32 0.0, %v525
    %v527 = vpop.f32.mrf.mxu0
    %528 = vmatprep.mubr.bf16.mxu0 0
    %529 = vmatmul.mubr.bf16.gmra.mxu0 %v343
    %v530 = vpop.f32.mrf.mxu0
    %v531 = vadd.f32 0.0, %v530
    %v532 = vpop.f32.mrf.mxu0
    %v533 = vpop.f32.mrf.mxu0
    %v534 = vadd.f32 0.0, %v533
    %v535 = vpop.f32.mrf.mxu0
    %536 = vdwg.mxu0
    %v553 = vunpack.c.l.b16 %v344
    %v554 = vunpack.c.l.b16 %v345
    %v555 = vunpack.c.l.b16 %v346
    %v556 = vunpack.c.l.b16 %v347
    %v557 = vunpack.c.l.b16 %v348
    %v558 = vunpack.c.l.b16 %v349
    %v559 = vunpack.c.l.b16 %v350
    %v560 = vunpack.c.l.b16 %v351
    %v561 = vunpack.c.l.b16 %v352
    %v562 = vunpack.c.l.b16 %v353
    %v563 = vunpack.c.l.b16 %v354
    %v564 = vunpack.c.l.b16 %v355
    %v565 = vunpack.c.l.b16 %v356
    %v566 = vunpack.c.l.b16 %v357
    %v567 = vunpack.c.l.b16 %v358
    %v568 = vunpack.c.l.b16 %v359
    %v569 = vpack.c.b16 %v554, %v553
    %v570 = vpack.c.b16 %v556, %v555
    %v571 = vpack.c.b16 %v558, %v557
    %v572 = vpack.c.b16 %v560, %v559
    %v573 = vpack.c.b16 %v562, %v561
    %v574 = vpack.c.b16 %v564, %v563
    %v575 = vpack.c.b16 %v566, %v565
    %v576 = vpack.c.b16 %v568, %v567
    %v601 = vunpack.c.l.b16 %v360
    %v602 = vunpack.c.l.b16 %v361
    %v603 = vunpack.c.l.b16 %v362
    %v604 = vunpack.c.l.b16 %v363
    %v605 = vunpack.c.l.b16 %v364
    %v606 = vunpack.c.l.b16 %v365
    %v607 = vunpack.c.l.b16 %v366
    %v608 = vunpack.c.l.b16 %v367
    %v609 = vunpack.c.l.b16 %v368
    %v610 = vunpack.c.l.b16 %v369
    %v611 = vunpack.c.l.b16 %v370
    %v612 = vunpack.c.l.b16 %v371
    %v613 = vunpack.c.l.b16 %v372
    %v614 = vunpack.c.l.b16 %v373
    %v615 = vunpack.c.l.b16 %v374
    %v616 = vunpack.c.l.b16 %v375
    %v617 = vpack.c.b16 %v602, %v601
    %v618 = vpack.c.b16 %v604, %v603
    %v619 = vpack.c.b16 %v606, %v605
    %v620 = vpack.c.b16 %v608, %v607
    %v621 = vpack.c.b16 %v610, %v609
    %v622 = vpack.c.b16 %v612, %v611
    %v623 = vpack.c.b16 %v614, %v613
    %v624 = vpack.c.b16 %v616, %v615
    %633 = vmatprep.subr.bf16.mxu0 0
    %634 = vmatpush1.bf16.msra.mxu0 %v624
    %635 = vmatprep.subr.bf16.mxu0 0
    %636 = vmatpush1.bf16.msra.mxu0 %v623
    %637 = vmatprep.subr.bf16.mxu0 0
    %638 = vmatpush1.bf16.msra.mxu0 %v622
    %639 = vmatprep.subr.bf16.mxu0 0
    %640 = vmatpush1.bf16.msra.mxu0 %v621
    %641 = vmatprep.subr.bf16.mxu0 0
    %642 = vmatpush1.bf16.msra.mxu0 %v620
    %643 = vmatprep.subr.bf16.mxu0 0
    %644 = vmatpush1.bf16.msra.mxu0 %v619
    %645 = vmatprep.subr.bf16.mxu0 0
    %646 = vmatpush1.bf16.msra.mxu0 %v618
    %647 = vmatprep.subr.bf16.mxu0 0
    %648 = vmatpush1.bf16.msra.mxu0 %v617
    %649 = vmatprep.subr.bf16.mxu0 0
    %650 = vmatpush2.bf16.msra.mxu0 0
    %651 = vmatprep.subr.bf16.mxu0 0
    %652 = vmatpush2.bf16.msra.mxu0 0
    %653 = vmatprep.subr.bf16.mxu0 0
    %654 = vmatpush2.bf16.msra.mxu0 0
    %655 = vmatprep.subr.bf16.mxu0 0
    %656 = vmatpush2.bf16.msra.mxu0 0
    %657 = vmatprep.subr.bf16.mxu0 0
    %658 = vmatpush2.bf16.msra.mxu0 0
    %659 = vmatprep.subr.bf16.mxu0 0
    %660 = vmatpush2.bf16.msra.mxu0 0
    %661 = vmatprep.subr.bf16.mxu0 0
    %662 = vmatpush2.bf16.msra.mxu0 0
    %663 = vmatprep.subr.bf16.mxu0 0
    %664 = vmatpush2.bf16.msra.mxu0 0
    %665 = vmatprep.mubr.bf16.mxu0 0
    %666 = vmatmul.mubr.bf16.gmra.mxu0 %v569
    %v667 = vpop.f32.mrf.mxu0
    %v668 = vadd.f32 %v475, %v667
    %v669 = vpop.f32.mrf.mxu0
    %v670 = vpop.f32.mrf.mxu0
    %v671 = vadd.f32 %v478, %v670
    %v672 = vpop.f32.mrf.mxu0
    %673 = vmatprep.mubr.bf16.mxu0 0
    %674 = vmatmul.mubr.bf16.gmra.mxu0 %v570
    %v675 = vpop.f32.mrf.mxu0
    %v676 = vadd.f32 %v483, %v675
    %v677 = vpop.f32.mrf.mxu0
    %v678 = vpop.f32.mrf.mxu0
    %v679 = vadd.f32 %v486, %v678
    %v680 = vpop.f32.mrf.mxu0
    %681 = vmatprep.mubr.bf16.mxu0 0
    %682 = vmatmul.mubr.bf16.gmra.mxu0 %v571
    %v683 = vpop.f32.mrf.mxu0
    %v684 = vadd.f32 %v491, %v683
    %v685 = vpop.f32.mrf.mxu0
    %v686 = vpop.f32.mrf.mxu0
    %v687 = vadd.f32 %v494, %v686
    %v688 = vpop.f32.mrf.mxu0
    %689 = vmatprep.mubr.bf16.mxu0 0
    %690 = vmatmul.mubr.bf16.gmra.mxu0 %v572
    %v691 = vpop.f32.mrf.mxu0
    %v692 = vadd.f32 %v499, %v691
    %v693 = vpop.f32.mrf.mxu0
    %v694 = vpop.f32.mrf.mxu0
    %v695 = vadd.f32 %v502, %v694
    %v696 = vpop.f32.mrf.mxu0
    %697 = vmatprep.mubr.bf16.mxu0 0
    %698 = vmatmul.mubr.bf16.gmra.mxu0 %v573
    %v699 = vpop.f32.mrf.mxu0
    %v700 = vadd.f32 %v507, %v699
    %v701 = vpop.f32.mrf.mxu0
    %v702 = vpop.f32.mrf.mxu0
    %v703 = vadd.f32 %v510, %v702
    %v704 = vpop.f32.mrf.mxu0
    %705 = vmatprep.mubr.bf16.mxu0 0
    %706 = vmatmul.mubr.bf16.gmra.mxu0 %v574
    %v707 = vpop.f32.mrf.mxu0
    %v708 = vadd.f32 %v515, %v707
    %v709 = vpop.f32.mrf.mxu0
    %v710 = vpop.f32.mrf.mxu0
    %v711 = vadd.f32 %v518, %v710
    %v712 = vpop.f32.mrf.mxu0
    %713 = vmatprep.mubr.bf16.mxu0 0
    %714 = vmatmul.mubr.bf16.gmra.mxu0 %v575
    %v715 = vpop.f32.mrf.mxu0
    %v716 = vadd.f32 %v523, %v715
    %v717 = vpop.f32.mrf.mxu0
    %v718 = vpop.f32.mrf.mxu0
    %v719 = vadd.f32 %v526, %v718
    %v720 = vpop.f32.mrf.mxu0
    %721 = vmatprep.mubr.bf16.mxu0 0
    %722 = vmatmul.mubr.bf16.gmra.mxu0 %v576
    %v723 = vpop.f32.mrf.mxu0
    %v724 = vadd.f32 %v531, %v723
    %v725 = vpop.f32.mrf.mxu0
    %v726 = vpop.f32.mrf.mxu0
    %v727 = vadd.f32 %v534, %v726
    %v728 = vpop.f32.mrf.mxu0
    %729 = vdwg.mxu0
    %v730 = vld [vmem:[%s5] sm:$0x1]
    %v732 = vlaneseq
    %v733 = vshrl.u32 %v732, 7
    %v734 = vsub.s32 0, %v733
    %v735 = vrot.slane %v730, %v734
    %v737 = vadd.f32 %v668, %v735
    %v738 = vadd.f32 %v671, %v735
    %v739 = vadd.f32 %v676, %v735
    %v740 = vadd.f32 %v679, %v735
    %v741 = vadd.f32 %v684, %v735
    %v742 = vadd.f32 %v687, %v735
    %v743 = vadd.f32 %v692, %v735
    %v744 = vadd.f32 %v695, %v735
    %v745 = vadd.f32 %v700, %v735
    %v746 = vadd.f32 %v703, %v735
    %v747 = vadd.f32 %v708, %v735
    %v748 = vadd.f32 %v711, %v735
    %v749 = vadd.f32 %v716, %v735
    %v750 = vadd.f32 %v719, %v735
    %v751 = vadd.f32 %v724, %v735
    %v752 = vadd.f32 %v727, %v735
    %753 = vst [vmem:[%s6] sm:$0xff] %v737
    %754 = vst [vmem:[%s6 + $0x8] sm:$0xff] %v738
    %755 = vst [vmem:[%s6 + $0x10] sm:$0xff] %v739
    %756 = vst [vmem:[%s6 + $0x18] sm:$0xff] %v740
    %757 = vst [vmem:[%s6 + $0x20] sm:$0xff] %v741
    %758 = vst [vmem:[%s6 + $0x28] sm:$0xff] %v742
    %759 = vst [vmem:[%s6 + $0x30] sm:$0xff] %v743
    %760 = vst [vmem:[%s6 + $0x38] sm:$0xff] %v744
    %761 = vst [vmem:[%s6 + $0x40] sm:$0xff] %v745
    %762 = vst [vmem:[%s6 + $0x48] sm:$0xff] %v746
    %763 = vst [vmem:[%s6 + $0x50] sm:$0xff] %v747
    %764 = vst [vmem:[%s6 + $0x58] sm:$0xff] %v748
    %765 = vst [vmem:[%s6 + $0x60] sm:$0xff] %v749
    %766 = vst [vmem:[%s6 + $0x68] sm:$0xff] %v750
    %767 = vst [vmem:[%s6 + $0x70] sm:$0xff] %v751
    %768 = vst [vmem:[%s6 + $0x78] sm:$0xff] %v752
  $region33: #{sagenet_forward.3} parent=0 // pred_fallthru
    _
  // Predicated region
  $region34: #{sagenet_forward.3} parent=0 // pred_check
    _
  $region35: #{sagenet_forward.3} parent=0 // pred_check_branch
    %770 = sbr.rel (0) target = $region37
  $region36: #{sagenet_forward.3} parent=0 // pred_region
    _
  $region37: #{sagenet_forward.3} parent=0 // pred_fallthru
    _
  // Predicated region
  $region38: #{sagenet_forward.3} parent=0 // pred_check
    _
  $region39: #{sagenet_forward.3} parent=0 // pred_check_branch
    %772 = sbr.rel (0) target = $region41
  $region40: #{sagenet_forward.3} parent=0 // pred_region
    _
  $region41: #{sagenet_forward.3} parent=0 // pred_fallthru
    _

// kernel: sagenet_forward.2
$region0: #{sagenet_forward.2}
  #allocation0 [shape = 'u32[]', space=smem, size = 0x4, offset = 0x4, fixed_abs, tag = 'smem constant byte address 0x4 - core index']
  #allocation1 [shape = 'u32[144,128]{1,0:T(1,128)}', space=vmem, size = 0x12000, scoped, tag = 'internal scratch']
  #allocation2 [shape = 'f32[128,128]{1,0:T(8,128)}', space=vmem, size = 0x10000, scoped, tag = 'scratch operand']
  %s0 = inlined_call_operand.vmem [shape: bf16[128,128], index: 0, kind: input, shape index: {}, may-alias: {0,2}]
  %s1 = inlined_call_operand.vmem [shape: bf16[128,128], index: 1, kind: input, shape index: {}]
  %s2 = inlined_call_operand.vmem [shape: bf16[128,128], index: 2, kind: input, shape index: {}, may-alias: {0,2}]
  %s3 = inlined_call_operand.vmem [shape: bf16[128,128], index: 3, kind: input, shape index: {}]
  %s4 = inlined_call_operand.vmem [shape: bf16[128,128], index: 4, kind: input, shape index: {}]
  %s5 = inlined_call_operand.vmem [shape: f32[1,128], index: 5, kind: input, shape index: {}]
  %s6 = inlined_call_operand.vmem [shape: bf16[128,128], index: 6, kind: output, shape index: {}]
  %s7 = sld [smem:[#allocation0]]
  $region42: #{sagenet_forward.2} parent=0
    _
  %s9 = ssub.s32 1, %s7
  %s10 = scalar_select 0, %s9, %s7
  // Predicated region
  $region2: #{sagenet_forward.2} parent=0 // pred_check
    _
  $region3: #{sagenet_forward.2} parent=0 // pred_check_branch
    %12 = sbr.rel (0) target = $region5
  $region4: #{sagenet_forward.2} parent=0 // pred_region
    _
  $region5: #{sagenet_forward.2} parent=0 // pred_fallthru
    _
  // Predicated region
  $region6: #{sagenet_forward.2} parent=0 // pred_check
    _
  $region7: #{sagenet_forward.2} parent=0 // pred_check_branch
    %14 = sbr.rel (0) target = $region9
  $region8: #{sagenet_forward.2} parent=0 // pred_region
    _
  $region9: #{sagenet_forward.2} parent=0 // pred_fallthru
    _
  // Predicated region
  $region10: #{sagenet_forward.2} parent=0 // pred_check
    _
  $region11: #{sagenet_forward.2} parent=0 // pred_check_branch
    %16 = sbr.rel (0) target = $region13
  $region12: #{sagenet_forward.2} parent=0 // pred_region
    _
  $region13: #{sagenet_forward.2} parent=0 // pred_fallthru
    _
  // Predicated region
  $region14: #{sagenet_forward.2} parent=0 // pred_check
    _
  $region15: #{sagenet_forward.2} parent=0 // pred_check_branch
    %18 = sbr.rel (0) target = $region17
  $region16: #{sagenet_forward.2} parent=0 // pred_region
    _
  $region17: #{sagenet_forward.2} parent=0 // pred_fallthru
    _
  // Predicated region
  $region18: #{sagenet_forward.2} parent=0 // pred_check
    _
  $region19: #{sagenet_forward.2} parent=0 // pred_check_branch
    %20 = sbr.rel (0) target = $region21
  $region20: #{sagenet_forward.2} parent=0 // pred_region
    _
  $region21: #{sagenet_forward.2} parent=0 // pred_fallthru
    _
  // Predicated region
  $region22: #{sagenet_forward.2} parent=0 // pred_check
    _
  $region23: #{sagenet_forward.2} parent=0 // pred_check_branch
    %22 = sbr.rel (0) target = $region25
  $region24: #{sagenet_forward.2} parent=0 // pred_region
    _
  $region25: #{sagenet_forward.2} parent=0 // pred_fallthru
    _
  %p24 = scmp.eq.s32.totalorder 0, 0
  // Predicated region
  $region26: #{sagenet_forward.2} parent=0 // pred_check
    %p25 = pneg %p24
  $region27: #{sagenet_forward.2} parent=0 // pred_check_branch
    %27 = sbr.rel (%p25) target = $region29
  $region28: #{sagenet_forward.2} parent=0 // pred_region
    %28 = vst [vmem:[#allocation2] sm:$0xff] 0.0
    %29 = vst [vmem:[#allocation2 + $0x8] sm:$0xff] 0.0
    %30 = vst [vmem:[#allocation2 + $0x10] sm:$0xff] 0.0
    %31 = vst [vmem:[#allocation2 + $0x18] sm:$0xff] 0.0
    %32 = vst [vmem:[#allocation2 + $0x20] sm:$0xff] 0.0
    %33 = vst [vmem:[#allocation2 + $0x28] sm:$0xff] 0.0
    %34 = vst [vmem:[#allocation2 + $0x30] sm:$0xff] 0.0
    %35 = vst [vmem:[#allocation2 + $0x38] sm:$0xff] 0.0
    %36 = vst [vmem:[#allocation2 + $0x40] sm:$0xff] 0.0
    %37 = vst [vmem:[#allocation2 + $0x48] sm:$0xff] 0.0
    %38 = vst [vmem:[#allocation2 + $0x50] sm:$0xff] 0.0
    %39 = vst [vmem:[#allocation2 + $0x58] sm:$0xff] 0.0
    %40 = vst [vmem:[#allocation2 + $0x60] sm:$0xff] 0.0
    %41 = vst [vmem:[#allocation2 + $0x68] sm:$0xff] 0.0
    %42 = vst [vmem:[#allocation2 + $0x70] sm:$0xff] 0.0
    %43 = vst [vmem:[#allocation2 + $0x78] sm:$0xff] 0.0
  $region29: #{sagenet_forward.2} parent=0 // pred_fallthru
    _
  %v44 = vld [vmem:[#allocation2] sm:$0xff]
  %v45 = vld [vmem:[#allocation2 + $0x8] sm:$0xff]
  %v46 = vld [vmem:[#allocation2 + $0x10] sm:$0xff]
  %v47 = vld [vmem:[#allocation2 + $0x18] sm:$0xff]
  %v48 = vld [vmem:[#allocation2 + $0x20] sm:$0xff]
  %v49 = vld [vmem:[#allocation2 + $0x28] sm:$0xff]
  %v50 = vld [vmem:[#allocation2 + $0x30] sm:$0xff]
  %v51 = vld [vmem:[#allocation2 + $0x38] sm:$0xff]
  %v52 = vld [vmem:[#allocation2 + $0x40] sm:$0xff]
  %v53 = vld [vmem:[#allocation2 + $0x48] sm:$0xff]
  %v54 = vld [vmem:[#allocation2 + $0x50] sm:$0xff]
  %v55 = vld [vmem:[#allocation2 + $0x58] sm:$0xff]
  %v56 = vld [vmem:[#allocation2 + $0x60] sm:$0xff]
  %v57 = vld [vmem:[#allocation2 + $0x68] sm:$0xff]
  %v58 = vld [vmem:[#allocation2 + $0x70] sm:$0xff]
  %v59 = vld [vmem:[#allocation2 + $0x78] sm:$0xff]
  %v60 = vld [vmem:[%s1] sm:$0xf]
  %v61 = vld [vmem:[%s1 + $0x4] sm:$0xf]
  %v62 = vld [vmem:[%s1 + $0x8] sm:$0xf]
  %v63 = vld [vmem:[%s1 + $0xc] sm:$0xf]
  %v64 = vld [vmem:[%s1 + $0x10] sm:$0xf]
  %v65 = vld [vmem:[%s1 + $0x14] sm:$0xf]
  %v66 = vld [vmem:[%s1 + $0x18] sm:$0xf]
  %v67 = vld [vmem:[%s1 + $0x1c] sm:$0xf]
  %v68 = vld [vmem:[%s1 + $0x20] sm:$0xf]
  %v69 = vld [vmem:[%s1 + $0x24] sm:$0xf]
  %v70 = vld [vmem:[%s1 + $0x28] sm:$0xf]
  %v71 = vld [vmem:[%s1 + $0x2c] sm:$0xf]
  %v72 = vld [vmem:[%s1 + $0x30] sm:$0xf]
  %v73 = vld [vmem:[%s1 + $0x34] sm:$0xf]
  %v74 = vld [vmem:[%s1 + $0x38] sm:$0xf]
  %v75 = vld [vmem:[%s1 + $0x3c] sm:$0xf]
  %v76 = vld [vmem:[%s2] sm:$0xf]
  %v77 = vld [vmem:[%s2 + $0x4] sm:$0xf]
  %v78 = vld [vmem:[%s2 + $0x8] sm:$0xf]
  %v79 = vld [vmem:[%s2 + $0xc] sm:$0xf]
  %v80 = vld [vmem:[%s2 + $0x10] sm:$0xf]
  %v81 = vld [vmem:[%s2 + $0x14] sm:$0xf]
  %v82 = vld [vmem:[%s2 + $0x18] sm:$0xf]
  %v83 = vld [vmem:[%s2 + $0x1c] sm:$0xf]
  %v84 = vld [vmem:[%s2 + $0x20] sm:$0xf]
  %v85 = vld [vmem:[%s2 + $0x24] sm:$0xf]
  %v86 = vld [vmem:[%s2 + $0x28] sm:$0xf]
  %v87 = vld [vmem:[%s2 + $0x2c] sm:$0xf]
  %v88 = vld [vmem:[%s2 + $0x30] sm:$0xf]
  %v89 = vld [vmem:[%s2 + $0x34] sm:$0xf]
  %v90 = vld [vmem:[%s2 + $0x38] sm:$0xf]
  %v91 = vld [vmem:[%s2 + $0x3c] sm:$0xf]
  %v108 = vunpack.c.l.b16 %v60
  %v109 = vunpack.c.l.b16 %v61
  %v110 = vunpack.c.l.b16 %v62
  %v111 = vunpack.c.l.b16 %v63
  %v112 = vunpack.c.l.b16 %v64
  %v113 = vunpack.c.l.b16 %v65
  %v114 = vunpack.c.l.b16 %v66
  %v115 = vunpack.c.l.b16 %v67
  %v116 = vunpack.c.l.b16 %v68
  %v117 = vunpack.c.l.b16 %v69
  %v118 = vunpack.c.l.b16 %v70
  %v119 = vunpack.c.l.b16 %v71
  %v120 = vunpack.c.l.b16 %v72
  %v121 = vunpack.c.l.b16 %v73
  %v122 = vunpack.c.l.b16 %v74
  %v123 = vunpack.c.l.b16 %v75
  %v124 = vpack.c.b16 %v109, %v108
  %v125 = vpack.c.b16 %v111, %v110
  %v126 = vpack.c.b16 %v113, %v112
  %v127 = vpack.c.b16 %v115, %v114
  %v128 = vpack.c.b16 %v117, %v116
  %v129 = vpack.c.b16 %v119, %v118
  %v130 = vpack.c.b16 %v121, %v120
  %v131 = vpack.c.b16 %v123, %v122
  %v156 = vunpack.c.l.b16 %v76
  %v157 = vunpack.c.l.b16 %v77
  %v158 = vunpack.c.l.b16 %v78
  %v159 = vunpack.c.l.b16 %v79
  %v160 = vunpack.c.l.b16 %v80
  %v161 = vunpack.c.l.b16 %v81
  %v162 = vunpack.c.l.b16 %v82
  %v163 = vunpack.c.l.b16 %v83
  %v164 = vunpack.c.l.b16 %v84
  %v165 = vunpack.c.l.b16 %v85
  %v166 = vunpack.c.l.b16 %v86
  %v167 = vunpack.c.l.b16 %v87
  %v168 = vunpack.c.l.b16 %v88
  %v169 = vunpack.c.l.b16 %v89
  %v170 = vunpack.c.l.b16 %v90
  %v171 = vunpack.c.l.b16 %v91
  %v172 = vpack.c.b16 %v157, %v156
  %v173 = vpack.c.b16 %v159, %v158
  %v174 = vpack.c.b16 %v161, %v160
  %v175 = vpack.c.b16 %v163, %v162
  %v176 = vpack.c.b16 %v165, %v164
  %v177 = vpack.c.b16 %v167, %v166
  %v178 = vpack.c.b16 %v169, %v168
  %v179 = vpack.c.b16 %v171, %v170
  %188 = vmatprep.subr.bf16.mxu0 0
  %189 = vmatpush1.bf16.msra.mxu0 %v179
  %190 = vmatprep.subr.bf16.mxu0 0
  %191 = vmatpush1.bf16.msra.mxu0 %v178
  %192 = vmatprep.subr.bf16.mxu0 0
  %193 = vmatpush1.bf16.msra.mxu0 %v177
  %194 = vmatprep.subr.bf16.mxu0 0
  %195 = vmatpush1.bf16.msra.mxu0 %v176
  %196 = vmatprep.subr.bf16.mxu0 0
  %197 = vmatpush1.bf16.msra.mxu0 %v175
  %198 = vmatprep.subr.bf16.mxu0 0
  %199 = vmatpush1.bf16.msra.mxu0 %v174
  %200 = vmatprep.subr.bf16.mxu0 0
  %201 = vmatpush1.bf16.msra.mxu0 %v173
  %202 = vmatprep.subr.bf16.mxu0 0
  %203 = vmatpush1.bf16.msra.mxu0 %v172
  %204 = vmatprep.subr.bf16.mxu0 0
  %205 = vmatpush2.bf16.msra.mxu0 0
  %206 = vmatprep.subr.bf16.mxu0 0
  %207 = vmatpush2.bf16.msra.mxu0 0
  %208 = vmatprep.subr.bf16.mxu0 0
  %209 = vmatpush2.bf16.msra.mxu0 0
  %210 = vmatprep.subr.bf16.mxu0 0
  %211 = vmatpush2.bf16.msra.mxu0 0
  %212 = vmatprep.subr.bf16.mxu0 0
  %213 = vmatpush2.bf16.msra.mxu0 0
  %214 = vmatprep.subr.bf16.mxu0 0
  %215 = vmatpush2.bf16.msra.mxu0 0
  %216 = vmatprep.subr.bf16.mxu0 0
  %217 = vmatpush2.bf16.msra.mxu0 0
  %218 = vmatprep.subr.bf16.mxu0 0
  %219 = vmatpush2.bf16.msra.mxu0 0
  %220 = vmatprep.mubr.bf16.mxu0 0
  %221 = vmatmul.mubr.bf16.gmra.mxu0 %v124
  %v222 = vpop.f32.mrf.mxu0
  %v223 = vadd.f32 0.0, %v222
  %v224 = vpop.f32.mrf.mxu0
  %v225 = vpop.f32.mrf.mxu0
  %v226 = vadd.f32 0.0, %v225
  %v227 = vpop.f32.mrf.mxu0
  %228 = vmatprep.mubr.bf16.mxu0 0
  %229 = vmatmul.mubr.bf16.gmra.mxu0 %v125
  %v230 = vpop.f32.mrf.mxu0
  %v231 = vadd.f32 0.0, %v230
  %v232 = vpop.f32.mrf.mxu0
  %v233 = vpop.f32.mrf.mxu0
  %v234 = vadd.f32 0.0, %v233
  %v235 = vpop.f32.mrf.mxu0
  %236 = vmatprep.mubr.bf16.mxu0 0
  %237 = vmatmul.mubr.bf16.gmra.mxu0 %v126
  %v238 = vpop.f32.mrf.mxu0
  %v239 = vadd.f32 0.0, %v238
  %v240 = vpop.f32.mrf.mxu0
  %v241 = vpop.f32.mrf.mxu0
  %v242 = vadd.f32 0.0, %v241
  %v243 = vpop.f32.mrf.mxu0
  %244 = vmatprep.mubr.bf16.mxu0 0
  %245 = vmatmul.mubr.bf16.gmra.mxu0 %v127
  %v246 = vpop.f32.mrf.mxu0
  %v247 = vadd.f32 0.0, %v246
  %v248 = vpop.f32.mrf.mxu0
  %v249 = vpop.f32.mrf.mxu0
  %v250 = vadd.f32 0.0, %v249
  %v251 = vpop.f32.mrf.mxu0
  %252 = vmatprep.mubr.bf16.mxu0 0
  %253 = vmatmul.mubr.bf16.gmra.mxu0 %v128
  %v254 = vpop.f32.mrf.mxu0
  %v255 = vadd.f32 0.0, %v254
  %v256 = vpop.f32.mrf.mxu0
  %v257 = vpop.f32.mrf.mxu0
  %v258 = vadd.f32 0.0, %v257
  %v259 = vpop.f32.mrf.mxu0
  %260 = vmatprep.mubr.bf16.mxu0 0
  %261 = vmatmul.mubr.bf16.gmra.mxu0 %v129
  %v262 = vpop.f32.mrf.mxu0
  %v263 = vadd.f32 0.0, %v262
  %v264 = vpop.f32.mrf.mxu0
  %v265 = vpop.f32.mrf.mxu0
  %v266 = vadd.f32 0.0, %v265
  %v267 = vpop.f32.mrf.mxu0
  %268 = vmatprep.mubr.bf16.mxu0 0
  %269 = vmatmul.mubr.bf16.gmra.mxu0 %v130
  %v270 = vpop.f32.mrf.mxu0
  %v271 = vadd.f32 0.0, %v270
  %v272 = vpop.f32.mrf.mxu0
  %v273 = vpop.f32.mrf.mxu0
  %v274 = vadd.f32 0.0, %v273
  %v275 = vpop.f32.mrf.mxu0
  %276 = vmatprep.mubr.bf16.mxu0 0
  %277 = vmatmul.mubr.bf16.gmra.mxu0 %v131
  %v278 = vpop.f32.mrf.mxu0
  %v279 = vadd.f32 0.0, %v278
  %v280 = vpop.f32.mrf.mxu0
  %v281 = vpop.f32.mrf.mxu0
  %v282 = vadd.f32 0.0, %v281
  %v283 = vpop.f32.mrf.mxu0
  %284 = vdwg.mxu0
  %v285 = vadd.f32 %v44, %v223
  %v286 = vadd.f32 %v45, %v226
  %v287 = vadd.f32 %v46, %v231
  %v288 = vadd.f32 %v47, %v234
  %v289 = vadd.f32 %v48, %v239
  %v290 = vadd.f32 %v49, %v242
  %v291 = vadd.f32 %v50, %v247
  %v292 = vadd.f32 %v51, %v250
  %v293 = vadd.f32 %v52, %v255
  %v294 = vadd.f32 %v53, %v258
  %v295 = vadd.f32 %v54, %v263
  %v296 = vadd.f32 %v55, %v266
  %v297 = vadd.f32 %v56, %v271
  %v298 = vadd.f32 %v57, %v274
  %v299 = vadd.f32 %v58, %v279
  %v300 = vadd.f32 %v59, %v282
  %301 = vst [vmem:[#allocation2] sm:$0xff] %v285
  %302 = vst [vmem:[#allocation2 + $0x8] sm:$0xff] %v286
  %303 = vst [vmem:[#allocation2 + $0x10] sm:$0xff] %v287
  %304 = vst [vmem:[#allocation2 + $0x18] sm:$0xff] %v288
  %305 = vst [vmem:[#allocation2 + $0x20] sm:$0xff] %v289
  %306 = vst [vmem:[#allocation2 + $0x28] sm:$0xff] %v290
  %307 = vst [vmem:[#allocation2 + $0x30] sm:$0xff] %v291
  %308 = vst [vmem:[#allocation2 + $0x38] sm:$0xff] %v292
  %309 = vst [vmem:[#allocation2 + $0x40] sm:$0xff] %v293
  %310 = vst [vmem:[#allocation2 + $0x48] sm:$0xff] %v294
  %311 = vst [vmem:[#allocation2 + $0x50] sm:$0xff] %v295
  %312 = vst [vmem:[#allocation2 + $0x58] sm:$0xff] %v296
  %313 = vst [vmem:[#allocation2 + $0x60] sm:$0xff] %v297
  %314 = vst [vmem:[#allocation2 + $0x68] sm:$0xff] %v298
  %315 = vst [vmem:[#allocation2 + $0x70] sm:$0xff] %v299
  %316 = vst [vmem:[#allocation2 + $0x78] sm:$0xff] %v300
  // Predicated region
  $region30: #{sagenet_forward.2} parent=0 // pred_check
    %p317 = pneg %p24
  $region31: #{sagenet_forward.2} parent=0 // pred_check_branch
    %319 = sbr.rel (%p317) target = $region33
  $region32: #{sagenet_forward.2} parent=0 // pred_region
    %v320 = vld [vmem:[#allocation2] sm:$0xff]
    %v321 = vld [vmem:[#allocation2 + $0x8] sm:$0xff]
    %v322 = vld [vmem:[#allocation2 + $0x10] sm:$0xff]
    %v323 = vld [vmem:[#allocation2 + $0x18] sm:$0xff]
    %v324 = vld [vmem:[#allocation2 + $0x20] sm:$0xff]
    %v325 = vld [vmem:[#allocation2 + $0x28] sm:$0xff]
    %v326 = vld [vmem:[#allocation2 + $0x30] sm:$0xff]
    %v327 = vld [vmem:[#allocation2 + $0x38] sm:$0xff]
    %v328 = vld [vmem:[#allocation2 + $0x40] sm:$0xff]
    %v329 = vld [vmem:[#allocation2 + $0x48] sm:$0xff]
    %v330 = vld [vmem:[#allocation2 + $0x50] sm:$0xff]
    %v331 = vld [vmem:[#allocation2 + $0x58] sm:$0xff]
    %v332 = vld [vmem:[#allocation2 + $0x60] sm:$0xff]
    %v333 = vld [vmem:[#allocation2 + $0x68] sm:$0xff]
    %v334 = vld [vmem:[#allocation2 + $0x70] sm:$0xff]
    %v335 = vld [vmem:[#allocation2 + $0x78] sm:$0xff]
    %v336 = vpack.c.bf16 %v321, %v320
    %v337 = vpack.c.bf16 %v323, %v322
    %v338 = vpack.c.bf16 %v325, %v324
    %v339 = vpack.c.bf16 %v327, %v326
    %v340 = vpack.c.bf16 %v329, %v328
    %v341 = vpack.c.bf16 %v331, %v330
    %v342 = vpack.c.bf16 %v333, %v332
    %v343 = vpack.c.bf16 %v335, %v334
    %v344 = vld [vmem:[%s0] sm:$0xf]
    %v345 = vld [vmem:[%s0 + $0x4] sm:$0xf]
    %v346 = vld [vmem:[%s0 + $0x8] sm:$0xf]
    %v347 = vld [vmem:[%s0 + $0xc] sm:$0xf]
    %v348 = vld [vmem:[%s0 + $0x10] sm:$0xf]
    %v349 = vld [vmem:[%s0 + $0x14] sm:$0xf]
    %v350 = vld [vmem:[%s0 + $0x18] sm:$0xf]
    %v351 = vld [vmem:[%s0 + $0x1c] sm:$0xf]
    %v352 = vld [vmem:[%s0 + $0x20] sm:$0xf]
    %v353 = vld [vmem:[%s0 + $0x24] sm:$0xf]
    %v354 = vld [vmem:[%s0 + $0x28] sm:$0xf]
    %v355 = vld [vmem:[%s0 + $0x2c] sm:$0xf]
    %v356 = vld [vmem:[%s0 + $0x30] sm:$0xf]
    %v357 = vld [vmem:[%s0 + $0x34] sm:$0xf]
    %v358 = vld [vmem:[%s0 + $0x38] sm:$0xf]
    %v359 = vld [vmem:[%s0 + $0x3c] sm:$0xf]
    %v360 = vld [vmem:[%s3] sm:$0xf]
    %v361 = vld [vmem:[%s3 + $0x4] sm:$0xf]
    %v362 = vld [vmem:[%s3 + $0x8] sm:$0xf]
    %v363 = vld [vmem:[%s3 + $0xc] sm:$0xf]
    %v364 = vld [vmem:[%s3 + $0x10] sm:$0xf]
    %v365 = vld [vmem:[%s3 + $0x14] sm:$0xf]
    %v366 = vld [vmem:[%s3 + $0x18] sm:$0xf]
    %v367 = vld [vmem:[%s3 + $0x1c] sm:$0xf]
    %v368 = vld [vmem:[%s3 + $0x20] sm:$0xf]
    %v369 = vld [vmem:[%s3 + $0x24] sm:$0xf]
    %v370 = vld [vmem:[%s3 + $0x28] sm:$0xf]
    %v371 = vld [vmem:[%s3 + $0x2c] sm:$0xf]
    %v372 = vld [vmem:[%s3 + $0x30] sm:$0xf]
    %v373 = vld [vmem:[%s3 + $0x34] sm:$0xf]
    %v374 = vld [vmem:[%s3 + $0x38] sm:$0xf]
    %v375 = vld [vmem:[%s3 + $0x3c] sm:$0xf]
    %v376 = vld [vmem:[%s4] sm:$0xf]
    %v377 = vld [vmem:[%s4 + $0x4] sm:$0xf]
    %v378 = vld [vmem:[%s4 + $0x8] sm:$0xf]
    %v379 = vld [vmem:[%s4 + $0xc] sm:$0xf]
    %v380 = vld [vmem:[%s4 + $0x10] sm:$0xf]
    %v381 = vld [vmem:[%s4 + $0x14] sm:$0xf]
    %v382 = vld [vmem:[%s4 + $0x18] sm:$0xf]
    %v383 = vld [vmem:[%s4 + $0x1c] sm:$0xf]
    %v384 = vld [vmem:[%s4 + $0x20] sm:$0xf]
    %v385 = vld [vmem:[%s4 + $0x24] sm:$0xf]
    %v386 = vld [vmem:[%s4 + $0x28] sm:$0xf]
    %v387 = vld [vmem:[%s4 + $0x2c] sm:$0xf]
    %v388 = vld [vmem:[%s4 + $0x30] sm:$0xf]
    %v389 = vld [vmem:[%s4 + $0x34] sm:$0xf]
    %v390 = vld [vmem:[%s4 + $0x38] sm:$0xf]
    %v391 = vld [vmem:[%s4 + $0x3c] sm:$0xf]
    %v408 = vunpack.c.l.b16 %v376
    %v409 = vunpack.c.l.b16 %v377
    %v410 = vunpack.c.l.b16 %v378
    %v411 = vunpack.c.l.b16 %v379
    %v412 = vunpack.c.l.b16 %v380
    %v413 = vunpack.c.l.b16 %v381
    %v414 = vunpack.c.l.b16 %v382
    %v415 = vunpack.c.l.b16 %v383
    %v416 = vunpack.c.l.b16 %v384
    %v417 = vunpack.c.l.b16 %v385
    %v418 = vunpack.c.l.b16 %v386
    %v419 = vunpack.c.l.b16 %v387
    %v420 = vunpack.c.l.b16 %v388
    %v421 = vunpack.c.l.b16 %v389
    %v422 = vunpack.c.l.b16 %v390
    %v423 = vunpack.c.l.b16 %v391
    %v424 = vpack.c.b16 %v409, %v408
    %v425 = vpack.c.b16 %v411, %v410
    %v426 = vpack.c.b16 %v413, %v412
    %v427 = vpack.c.b16 %v415, %v414
    %v428 = vpack.c.b16 %v417, %v416
    %v429 = vpack.c.b16 %v419, %v418
    %v430 = vpack.c.b16 %v421, %v420
    %v431 = vpack.c.b16 %v423, %v422
    %440 = vmatprep.subr.bf16.mxu0 0
    %441 = vmatpush1.bf16.msra.mxu0 %v431
    %442 = vmatprep.subr.bf16.mxu0 0
    %443 = vmatpush1.bf16.msra.mxu0 %v430
    %444 = vmatprep.subr.bf16.mxu0 0
    %445 = vmatpush1.bf16.msra.mxu0 %v429
    %446 = vmatprep.subr.bf16.mxu0 0
    %447 = vmatpush1.bf16.msra.mxu0 %v428
    %448 = vmatprep.subr.bf16.mxu0 0
    %449 = vmatpush1.bf16.msra.mxu0 %v427
    %450 = vmatprep.subr.bf16.mxu0 0
    %451 = vmatpush1.bf16.msra.mxu0 %v426
    %452 = vmatprep.subr.bf16.mxu0 0
    %453 = vmatpush1.bf16.msra.mxu0 %v425
    %454 = vmatprep.subr.bf16.mxu0 0
    %455 = vmatpush1.bf16.msra.mxu0 %v424
    %456 = vmatprep.subr.bf16.mxu0 0
    %457 = vmatpush2.bf16.msra.mxu0 0
    %458 = vmatprep.subr.bf16.mxu0 0
    %459 = vmatpush2.bf16.msra.mxu0 0
    %460 = vmatprep.subr.bf16.mxu0 0
    %461 = vmatpush2.bf16.msra.mxu0 0
    %462 = vmatprep.subr.bf16.mxu0 0
    %463 = vmatpush2.bf16.msra.mxu0 0
    %464 = vmatprep.subr.bf16.mxu0 0
    %465 = vmatpush2.bf16.msra.mxu0 0
    %466 = vmatprep.subr.bf16.mxu0 0
    %467 = vmatpush2.bf16.msra.mxu0 0
    %468 = vmatprep.subr.bf16.mxu0 0
    %469 = vmatpush2.bf16.msra.mxu0 0
    %470 = vmatprep.subr.bf16.mxu0 0
    %471 = vmatpush2.bf16.msra.mxu0 0
    %472 = vmatprep.mubr.bf16.mxu0 0
    %473 = vmatmul.mubr.bf16.gmra.mxu0 %v336
    %v474 = vpop.f32.mrf.mxu0
    %v475 = vadd.f32 0.0, %v474
    %v476 = vpop.f32.mrf.mxu0
    %v477 = vpop.f32.mrf.mxu0
    %v478 = vadd.f32 0.0, %v477
    %v479 = vpop.f32.mrf.mxu0
    %480 = vmatprep.mubr.bf16.mxu0 0
    %481 = vmatmul.mubr.bf16.gmra.mxu0 %v337
    %v482 = vpop.f32.mrf.mxu0
    %v483 = vadd.f32 0.0, %v482
    %v484 = vpop.f32.mrf.mxu0
    %v485 = vpop.f32.mrf.mxu0
    %v486 = vadd.f32 0.0, %v485
    %v487 = vpop.f32.mrf.mxu0
    %488 = vmatprep.mubr.bf16.mxu0 0
    %489 = vmatmul.mubr.bf16.gmra.mxu0 %v338
    %v490 = vpop.f32.mrf.mxu0
    %v491 = vadd.f32 0.0, %v490
    %v492 = vpop.f32.mrf.mxu0
    %v493 = vpop.f32.mrf.mxu0
    %v494 = vadd.f32 0.0, %v493
    %v495 = vpop.f32.mrf.mxu0
    %496 = vmatprep.mubr.bf16.mxu0 0
    %497 = vmatmul.mubr.bf16.gmra.mxu0 %v339
    %v498 = vpop.f32.mrf.mxu0
    %v499 = vadd.f32 0.0, %v498
    %v500 = vpop.f32.mrf.mxu0
    %v501 = vpop.f32.mrf.mxu0
    %v502 = vadd.f32 0.0, %v501
    %v503 = vpop.f32.mrf.mxu0
    %504 = vmatprep.mubr.bf16.mxu0 0
    %505 = vmatmul.mubr.bf16.gmra.mxu0 %v340
    %v506 = vpop.f32.mrf.mxu0
    %v507 = vadd.f32 0.0, %v506
    %v508 = vpop.f32.mrf.mxu0
    %v509 = vpop.f32.mrf.mxu0
    %v510 = vadd.f32 0.0, %v509
    %v511 = vpop.f32.mrf.mxu0
    %512 = vmatprep.mubr.bf16.mxu0 0
    %513 = vmatmul.mubr.bf16.gmra.mxu0 %v341
    %v514 = vpop.f32.mrf.mxu0
    %v515 = vadd.f32 0.0, %v514
    %v516 = vpop.f32.mrf.mxu0
    %v517 = vpop.f32.mrf.mxu0
    %v518 = vadd.f32 0.0, %v517
    %v519 = vpop.f32.mrf.mxu0
    %520 = vmatprep.mubr.bf16.mxu0 0
    %521 = vmatmul.mubr.bf16.gmra.mxu0 %v342
    %v522 = vpop.f32.mrf.mxu0
    %v523 = vadd.f32 0.0, %v522
    %v524 = vpop.f32.mrf.mxu0
    %v525 = vpop.f32.mrf.mxu0
    %v526 = vadd.f32 0.0, %v525
    %v527 = vpop.f32.mrf.mxu0
    %528 = vmatprep.mubr.bf16.mxu0 0
    %529 = vmatmul.mubr.bf16.gmra.mxu0 %v343
    %v530 = vpop.f32.mrf.mxu0
    %v531 = vadd.f32 0.0, %v530
    %v532 = vpop.f32.mrf.mxu0
    %v533 = vpop.f32.mrf.mxu0
    %v534 = vadd.f32 0.0, %v533
    %v535 = vpop.f32.mrf.mxu0
    %536 = vdwg.mxu0
    %v553 = vunpack.c.l.b16 %v344
    %v554 = vunpack.c.l.b16 %v345
    %v555 = vunpack.c.l.b16 %v346
    %v556 = vunpack.c.l.b16 %v347
    %v557 = vunpack.c.l.b16 %v348
    %v558 = vunpack.c.l.b16 %v349
    %v559 = vunpack.c.l.b16 %v350
    %v560 = vunpack.c.l.b16 %v351
    %v561 = vunpack.c.l.b16 %v352
    %v562 = vunpack.c.l.b16 %v353
    %v563 = vunpack.c.l.b16 %v354
    %v564 = vunpack.c.l.b16 %v355
    %v565 = vunpack.c.l.b16 %v356
    %v566 = vunpack.c.l.b16 %v357
    %v567 = vunpack.c.l.b16 %v358
    %v568 = vunpack.c.l.b16 %v359
    %v569 = vpack.c.b16 %v554, %v553
    %v570 = vpack.c.b16 %v556, %v555
    %v571 = vpack.c.b16 %v558, %v557
    %v572 = vpack.c.b16 %v560, %v559
    %v573 = vpack.c.b16 %v562, %v561
    %v574 = vpack.c.b16 %v564, %v563
    %v575 = vpack.c.b16 %v566, %v565
    %v576 = vpack.c.b16 %v568, %v567
    %v601 = vunpack.c.l.b16 %v360
    %v602 = vunpack.c.l.b16 %v361
    %v603 = vunpack.c.l.b16 %v362
    %v604 = vunpack.c.l.b16 %v363
    %v605 = vunpack.c.l.b16 %v364
    %v606 = vunpack.c.l.b16 %v365
    %v607 = vunpack.c.l.b16 %v366
    %v608 = vunpack.c.l.b16 %v367
    %v609 = vunpack.c.l.b16 %v368
    %v610 = vunpack.c.l.b16 %v369
    %v611 = vunpack.c.l.b16 %v370
    %v612 = vunpack.c.l.b16 %v371
    %v613 = vunpack.c.l.b16 %v372
    %v614 = vunpack.c.l.b16 %v373
    %v615 = vunpack.c.l.b16 %v374
    %v616 = vunpack.c.l.b16 %v375
    %v617 = vpack.c.b16 %v602, %v601
    %v618 = vpack.c.b16 %v604, %v603
    %v619 = vpack.c.b16 %v606, %v605
    %v620 = vpack.c.b16 %v608, %v607
    %v621 = vpack.c.b16 %v610, %v609
    %v622 = vpack.c.b16 %v612, %v611
    %v623 = vpack.c.b16 %v614, %v613
    %v624 = vpack.c.b16 %v616, %v615
    %633 = vmatprep.subr.bf16.mxu0 0
    %634 = vmatpush1.bf16.msra.mxu0 %v624
    %635 = vmatprep.subr.bf16.mxu0 0
    %636 = vmatpush1.bf16.msra.mxu0 %v623
    %637 = vmatprep.subr.bf16.mxu0 0
    %638 = vmatpush1.bf16.msra.mxu0 %v622
    %639 = vmatprep.subr.bf16.mxu0 0
    %640 = vmatpush1.bf16.msra.mxu0 %v621
    %641 = vmatprep.subr.bf16.mxu0 0
    %642 = vmatpush1.bf16.msra.mxu0 %v620
    %643 = vmatprep.subr.bf16.mxu0 0
    %644 = vmatpush1.bf16.msra.mxu0 %v619
    %645 = vmatprep.subr.bf16.mxu0 0
    %646 = vmatpush1.bf16.msra.mxu0 %v618
    %647 = vmatprep.subr.bf16.mxu0 0
    %648 = vmatpush1.bf16.msra.mxu0 %v617
    %649 = vmatprep.subr.bf16.mxu0 0
    %650 = vmatpush2.bf16.msra.mxu0 0
    %651 = vmatprep.subr.bf16.mxu0 0
    %652 = vmatpush2.bf16.msra.mxu0 0
    %653 = vmatprep.subr.bf16.mxu0 0
    %654 = vmatpush2.bf16.msra.mxu0 0
    %655 = vmatprep.subr.bf16.mxu0 0
    %656 = vmatpush2.bf16.msra.mxu0 0
    %657 = vmatprep.subr.bf16.mxu0 0
    %658 = vmatpush2.bf16.msra.mxu0 0
    %659 = vmatprep.subr.bf16.mxu0 0
    %660 = vmatpush2.bf16.msra.mxu0 0
    %661 = vmatprep.subr.bf16.mxu0 0
    %662 = vmatpush2.bf16.msra.mxu0 0
    %663 = vmatprep.subr.bf16.mxu0 0
    %664 = vmatpush2.bf16.msra.mxu0 0
    %665 = vmatprep.mubr.bf16.mxu0 0
    %666 = vmatmul.mubr.bf16.gmra.mxu0 %v569
    %v667 = vpop.f32.mrf.mxu0
    %v668 = vadd.f32 %v475, %v667
    %v669 = vpop.f32.mrf.mxu0
    %v670 = vpop.f32.mrf.mxu0
    %v671 = vadd.f32 %v478, %v670
    %v672 = vpop.f32.mrf.mxu0
    %673 = vmatprep.mubr.bf16.mxu0 0
    %674 = vmatmul.mubr.bf16.gmra.mxu0 %v570
    %v675 = vpop.f32.mrf.mxu0
    %v676 = vadd.f32 %v483, %v675
    %v677 = vpop.f32.mrf.mxu0
    %v678 = vpop.f32.mrf.mxu0
    %v679 = vadd.f32 %v486, %v678
    %v680 = vpop.f32.mrf.mxu0
    %681 = vmatprep.mubr.bf16.mxu0 0
    %682 = vmatmul.mubr.bf16.gmra.mxu0 %v571
    %v683 = vpop.f32.mrf.mxu0
    %v684 = vadd.f32 %v491, %v683
    %v685 = vpop.f32.mrf.mxu0
    %v686 = vpop.f32.mrf.mxu0
    %v687 = vadd.f32 %v494, %v686
    %v688 = vpop.f32.mrf.mxu0
    %689 = vmatprep.mubr.bf16.mxu0 0
    %690 = vmatmul.mubr.bf16.gmra.mxu0 %v572
    %v691 = vpop.f32.mrf.mxu0
    %v692 = vadd.f32 %v499, %v691
    %v693 = vpop.f32.mrf.mxu0
    %v694 = vpop.f32.mrf.mxu0
    %v695 = vadd.f32 %v502, %v694
    %v696 = vpop.f32.mrf.mxu0
    %697 = vmatprep.mubr.bf16.mxu0 0
    %698 = vmatmul.mubr.bf16.gmra.mxu0 %v573
    %v699 = vpop.f32.mrf.mxu0
    %v700 = vadd.f32 %v507, %v699
    %v701 = vpop.f32.mrf.mxu0
    %v702 = vpop.f32.mrf.mxu0
    %v703 = vadd.f32 %v510, %v702
    %v704 = vpop.f32.mrf.mxu0
    %705 = vmatprep.mubr.bf16.mxu0 0
    %706 = vmatmul.mubr.bf16.gmra.mxu0 %v574
    %v707 = vpop.f32.mrf.mxu0
    %v708 = vadd.f32 %v515, %v707
    %v709 = vpop.f32.mrf.mxu0
    %v710 = vpop.f32.mrf.mxu0
    %v711 = vadd.f32 %v518, %v710
    %v712 = vpop.f32.mrf.mxu0
    %713 = vmatprep.mubr.bf16.mxu0 0
    %714 = vmatmul.mubr.bf16.gmra.mxu0 %v575
    %v715 = vpop.f32.mrf.mxu0
    %v716 = vadd.f32 %v523, %v715
    %v717 = vpop.f32.mrf.mxu0
    %v718 = vpop.f32.mrf.mxu0
    %v719 = vadd.f32 %v526, %v718
    %v720 = vpop.f32.mrf.mxu0
    %721 = vmatprep.mubr.bf16.mxu0 0
    %722 = vmatmul.mubr.bf16.gmra.mxu0 %v576
    %v723 = vpop.f32.mrf.mxu0
    %v724 = vadd.f32 %v531, %v723
    %v725 = vpop.f32.mrf.mxu0
    %v726 = vpop.f32.mrf.mxu0
    %v727 = vadd.f32 %v534, %v726
    %v728 = vpop.f32.mrf.mxu0
    %729 = vdwg.mxu0
    %v730 = vld [vmem:[%s5] sm:$0x1]
    %v732 = vlaneseq
    %v733 = vshrl.u32 %v732, 7
    %v734 = vsub.s32 0, %v733
    %v735 = vrot.slane %v730, %v734
    %v737 = vadd.f32 %v668, %v735
    %v738 = vadd.f32 %v671, %v735
    %v739 = vadd.f32 %v676, %v735
    %v740 = vadd.f32 %v679, %v735
    %v741 = vadd.f32 %v684, %v735
    %v742 = vadd.f32 %v687, %v735
    %v743 = vadd.f32 %v692, %v735
    %v744 = vadd.f32 %v695, %v735
    %v745 = vadd.f32 %v700, %v735
    %v746 = vadd.f32 %v703, %v735
    %v747 = vadd.f32 %v708, %v735
    %v748 = vadd.f32 %v711, %v735
    %v749 = vadd.f32 %v716, %v735
    %v750 = vadd.f32 %v719, %v735
    %v751 = vadd.f32 %v724, %v735
    %v752 = vadd.f32 %v727, %v735
    %v753 = vmax.f32 %v737, 0.0
    %v754 = vmax.f32 %v738, 0.0
    %v755 = vmax.f32 %v739, 0.0
    %v756 = vmax.f32 %v740, 0.0
    %v757 = vmax.f32 %v741, 0.0
    %v758 = vmax.f32 %v742, 0.0
    %v759 = vmax.f32 %v743, 0.0
    %v760 = vmax.f32 %v744, 0.0
    %v761 = vmax.f32 %v745, 0.0
    %v762 = vmax.f32 %v746, 0.0
    %v763 = vmax.f32 %v747, 0.0
    %v764 = vmax.f32 %v748, 0.0
    %v765 = vmax.f32 %v749, 0.0
    %v766 = vmax.f32 %v750, 0.0
    %v767 = vmax.f32 %v751, 0.0
    %v768 = vmax.f32 %v752, 0.0
    %v769 = vpack.c.bf16 %v754, %v753
    %v770 = vpack.c.bf16 %v756, %v755
    %v771 = vpack.c.bf16 %v758, %v757
    %v772 = vpack.c.bf16 %v760, %v759
    %v773 = vpack.c.bf16 %v762, %v761
    %v774 = vpack.c.bf16 %v764, %v763
    %v775 = vpack.c.bf16 %v766, %v765
    %v776 = vpack.c.bf16 %v768, %v767
    %v785 = vunpack.c.l.b16 %v769
    %v786 = vunpack.c.h.b16 %v769
    %v787 = vunpack.c.l.b16 %v770
    %v788 = vunpack.c.h.b16 %v770
    %v789 = vunpack.c.l.b16 %v771
    %v790 = vunpack.c.h.b16 %v771
    %v791 = vunpack.c.l.b16 %v772
    %v792 = vunpack.c.h.b16 %v772
    %v793 = vunpack.c.l.b16 %v773
    %v794 = vunpack.c.h.b16 %v773
    %v795 = vunpack.c.l.b16 %v774
    %v796 = vunpack.c.h.b16 %v774
    %v797 = vunpack.c.l.b16 %v775
    %v798 = vunpack.c.h.b16 %v775
    %v799 = vunpack.c.l.b16 %v776
    %v800 = vunpack.c.h.b16 %v776
    %v801 = vpack.c.b16 %v785, %v785
    %v802 = vpack.c.b16 %v786, %v786
    %v803 = vpack.c.b16 %v787, %v787
    %v804 = vpack.c.b16 %v788, %v788
    %v805 = vpack.c.b16 %v789, %v789
    %v806 = vpack.c.b16 %v790, %v790
    %v807 = vpack.c.b16 %v791, %v791
    %v808 = vpack.c.b16 %v792, %v792
    %v809 = vpack.c.b16 %v793, %v793
    %v810 = vpack.c.b16 %v794, %v794
    %v811 = vpack.c.b16 %v795, %v795
    %v812 = vpack.c.b16 %v796, %v796
    %v813 = vpack.c.b16 %v797, %v797
    %v814 = vpack.c.b16 %v798, %v798
    %v815 = vpack.c.b16 %v799, %v799
    %v816 = vpack.c.b16 %v800, %v800
    %833 = vst [vmem:[%s6] sm:$0xf] %v801
    %834 = vst [vmem:[%s6 + $0x4] sm:$0xf] %v802
    %835 = vst [vmem:[%s6 + $0x8] sm:$0xf] %v803
    %836 = vst [vmem:[%s6 + $0xc] sm:$0xf] %v804
    %837 = vst [vmem:[%s6 + $0x10] sm:$0xf] %v805
    %838 = vst [vmem:[%s6 + $0x14] sm:$0xf] %v806
    %839 = vst [vmem:[%s6 + $0x18] sm:$0xf] %v807
    %840 = vst [vmem:[%s6 + $0x1c] sm:$0xf] %v808
    %841 = vst [vmem:[%s6 + $0x20] sm:$0xf] %v809
    %842 = vst [vmem:[%s6 + $0x24] sm:$0xf] %v810
    %843 = vst [vmem:[%s6 + $0x28] sm:$0xf] %v811
    %844 = vst [vmem:[%s6 + $0x2c] sm:$0xf] %v812
    %845 = vst [vmem:[%s6 + $0x30] sm:$0xf] %v813
    %846 = vst [vmem:[%s6 + $0x34] sm:$0xf] %v814
    %847 = vst [vmem:[%s6 + $0x38] sm:$0xf] %v815
    %848 = vst [vmem:[%s6 + $0x3c] sm:$0xf] %v816
  $region33: #{sagenet_forward.2} parent=0 // pred_fallthru
    _
  // Predicated region
  $region34: #{sagenet_forward.2} parent=0 // pred_check
    _
  $region35: #{sagenet_forward.2} parent=0 // pred_check_branch
    %850 = sbr.rel (0) target = $region37
  $region36: #{sagenet_forward.2} parent=0 // pred_region
    _
  $region37: #{sagenet_forward.2} parent=0 // pred_fallthru
    _
  // Predicated region
  $region38: #{sagenet_forward.2} parent=0 // pred_check
    _
  $region39: #{sagenet_forward.2} parent=0 // pred_check_branch
    %852 = sbr.rel (0) target = $region41
  $region40: #{sagenet_forward.2} parent=0 // pred_region
    _
  $region41: #{sagenet_forward.2} parent=0 // pred_fallthru
    _

</llo_original>
